<compile_context>
chip_gen: v5e
topology: v5e:2x2
jax: 0.10.0
libtpu: 0.0.40
codegen_flags: <defaults>
</compile_context>

<pallas_src>
import functools

import jax
import jax.numpy as jnp
from jax.experimental import pallas as pl
from jax.experimental.pallas import tpu as pltpu


_SQRT_HALF = 0.7071067811865476


def _gelu(x):
    # exact (erf-based) GELU, matching nn.GELU() default
    return 0.5 * x * (1.0 + jax.lax.erf(x * _SQRT_HALF))


def _layernorm(x, w, b, eps=1e-5):
    mu = jnp.mean(x, axis=-1, keepdims=True)
    var = jnp.mean((x - mu) ** 2, axis=-1, keepdims=True)
    return (x - mu) * jax.lax.rsqrt(var + eps) * w + b


def _softmax_last(s):
    m = jnp.max(s, axis=-1, keepdims=True)
    e = jnp.exp(s - m)
    # divide via EUP approx reciprocal (otherwise-idle slot)
    return e * pl.reciprocal(jnp.sum(e, axis=-1, keepdims=True), approx=True)


# --------------------------- fused forward kernel ---------------------------

def vit_forward_kernel(p_ref, cw_ref, cb_ref, cls_ref, pos_ref,
                       lnw_ref, lnb_ref, qkvw_ref, qkvb_ref,
                       pw_ref, pb_ref, f1w_ref, f1b_ref,
                       f2w_ref, f2b_ref, nw_ref, nb_ref,
                       hw_ref, hb_ref,
                       o_ref, x_scr, *, num_heads, seq_len):
    l = pl.program_id(1)
    n_layers = pl.num_programs(1)

    S_pad, D = x_scr.shape
    nh = num_heads
    hd = D // nh
    N = p_ref.shape[0]

    # ---- patch embedding (conv kernel==stride rewritten as matmul), l == 0 ----
    @pl.when(l == 0)
    def _():
        tok = jnp.dot(p_ref[...], cw_ref[...],
                      preferred_element_type=jnp.float32) + cb_ref[...]   # (N, D)
        x_scr[pl.ds(0, N), :] = tok
        # cls token goes LAST (torch.cat((x, cls_token), dim=1))
        x_scr[pl.ds(N, 1), :] = cls_ref[...]
        pad = S_pad - (N + 1)
        if pad > 0:
            x_scr[pl.ds(N + 1, pad), :] = jnp.zeros((pad, D), jnp.float32)
        # pos_embed is pre-padded with zero rows in the wrapper
        x_scr[...] = x_scr[...] + pos_ref[...]

    # additive mask for padded key columns (padded rows are finite -> safe)
    col = jax.lax.broadcasted_iota(jnp.int32, (1, S_pad), 1)
    kmask = jnp.where(col < seq_len, 0.0, -1e30).astype(jnp.float32)      # (1, S_pad)

    ln_w = lnw_ref[...]                 # (1, D)  -- shared by both sub-blocks
    ln_b = lnb_ref[...]
    x = x_scr[...]                      # (S_pad, D) f32 residual stream

    # ---- attention branch ----
    h = _layernorm(x, ln_w, ln_b)
    # fused QKV projection: one full-lane (S, D) @ (D, 3D) matmul
    # (1/sqrt(hd) scale is pre-folded into the Q columns in the wrapper)
    qkv = jnp.dot(h.astype(jnp.bfloat16), qkvw_ref[...],
                  preferred_element_type=jnp.float32) + qkvb_ref[...]     # (S_pad, 3D)

    ctx_parts = []
    for hh in range(nh):
        qh = qkv[:, hh * hd:(hh + 1) * hd].astype(jnp.bfloat16)           # (S_pad, hd)
        kh = qkv[:, D + hh * hd:D + (hh + 1) * hd].astype(jnp.bfloat16)
        vh = qkv[:, 2 * D + hh * hd:2 * D + (hh + 1) * hd].astype(jnp.bfloat16)
        s = jnp.dot(qh, kh.T, preferred_element_type=jnp.float32) + kmask  # (S_pad, S_pad)
        p = _softmax_last(s)
        ctx_parts.append(jnp.dot(p.astype(jnp.bfloat16), vh,
                                 preferred_element_type=jnp.float32))      # (S_pad, hd)
    ctx = jnp.concatenate(ctx_parts, axis=-1)                              # (S_pad, D)

    # concat-heads output projection: one (S, D) @ (D, D) matmul
    x = x + jnp.dot(ctx.astype(jnp.bfloat16), pw_ref[...],
                    preferred_element_type=jnp.float32) + pb_ref[...]

    # ---- MLP branch (same LayerNorm params; GELU after fc2 too — per reference) ----
    h2 = _layernorm(x, ln_w, ln_b)
    m1 = _gelu(jnp.dot(h2.astype(jnp.bfloat16), f1w_ref[...],
                       preferred_element_type=jnp.float32) + f1b_ref[...])
    m2 = _gelu(jnp.dot(m1.astype(jnp.bfloat16), f2w_ref[...],
                       preferred_element_type=jnp.float32) + f2b_ref[...])
    x = x + m2

    # write residual back to the persistent VMEM scratch
    x_scr[...] = x

    # ---- final LayerNorm + classification head (lane-padded output), last l ----
    @pl.when(l == n_layers - 1)
    def _():
        hf = _layernorm(x, nw_ref[...], nb_ref[...])
        o_ref[...] = jnp.dot(hf.astype(jnp.bfloat16), hw_ref[...],
                             preferred_element_type=jnp.float32) + hb_ref[...]


# ------------------------------ glue / wrapper -------------------------------

def extract_patches(x, patch):
    # NCHW -> (B, num_patches, C*patch*patch); patch vector ordering (C, ph, pw)
    B, C, H, W = x.shape
    hp, wp = H // patch, W // patch
    x = x.reshape(B, C, hp, patch, wp, patch)
    x = x.transpose(0, 2, 4, 1, 3, 5)              # B, hp, wp, C, ph, pw
    return x.reshape(B, hp * wp, C * patch * patch)


def vision_model_forward(x, params, cfg):
    B = x.shape[0]
    patch = cfg['patch_size']
    dim = cfg['dim']
    nh = cfg['num_heads']
    C = cfg['num_classes']
    hd = dim // nh

    patches = extract_patches(x, patch).astype(jnp.bfloat16)   # (B, N, K)
    _, N, K = patches.shape
    S = N + 1
    S_pad = ((S + 7) // 8) * 8                     # sublane-align the sequence
    depth = params['qkv_w'].shape[0]

    # fold the 1/sqrt(hd) attention scale into the Q columns of the fused QKV
    # weight / bias (free: happens once at trace time, outside the kernel)
    col_scale = jnp.concatenate([jnp.full((dim,), hd ** -0.5, jnp.float32),
                                 jnp.ones((2 * dim,), jnp.float32)])
    qkv_w = (params['qkv_w'] * col_scale).astype(jnp.bfloat16)
    qkv_b = params['qkv_b'] * col_scale            # bias stays f32

    # lane-pad the classification head so the kernel's only HBM store is a
    # full-lane unmasked vst; real classes sliced back out afterwards
    Cp = ((C + 127) // 128) * 128
    head_w = jnp.pad(params['head_w'], ((0, 0), (0, Cp - C))).astype(jnp.bfloat16)
    head_b = jnp.pad(params['head_b'], ((0, 0), (0, Cp - C)))

    cls = params['cls_token'].reshape(1, dim)
    pos = params['pos_embed'].reshape(S, dim)
    pos = jnp.pad(pos, ((0, S_pad - S), (0, 0)))   # zero rows for padded tokens

    conv_w = params['conv_w'].astype(jnp.bfloat16)
    proj_w = params['proj_w'].astype(jnp.bfloat16)
    fc1_w = params['fc1_w'].astype(jnp.bfloat16)
    fc2_w = params['fc2_w'].astype(jnp.bfloat16)

    inputs = (patches,
              conv_w, params['conv_b'], cls, pos,
              params['ln_w'], params['ln_b'],
              qkv_w, qkv_b,
              proj_w, params['proj_b'],
              fc1_w, params['fc1_b'],
              fc2_w, params['fc2_b'],
              params['norm_w'], params['norm_b'],
              head_w, head_b)

    def const_spec(a):
        nd = a.ndim
        return pl.BlockSpec(a.shape, lambda b, l, nd=nd: (0,) * nd)

    def layer_spec(a):
        # stacked on a leading depth axis; stream one layer's slice per grid
        # step (squeezed out of the kernel Ref)
        nd = a.ndim
        return pl.BlockSpec((None,) + a.shape[1:],
                            lambda b, l, nd=nd: (l,) + (0,) * (nd - 1))

    in_specs = [
        pl.BlockSpec((None, N, K), lambda b, l: (b, 0, 0)),     # patches
        const_spec(conv_w), const_spec(params['conv_b']),
        const_spec(cls), const_spec(pos),
        layer_spec(params['ln_w']), layer_spec(params['ln_b']),
        layer_spec(qkv_w), layer_spec(qkv_b),
        layer_spec(proj_w), layer_spec(params['proj_b']),
        layer_spec(fc1_w), layer_spec(params['fc1_b']),
        layer_spec(fc2_w), layer_spec(params['fc2_b']),
        const_spec(params['norm_w']), const_spec(params['norm_b']),
        const_spec(head_w), const_spec(head_b),
    ]

    kern = functools.partial(vit_forward_kernel, num_heads=nh, seq_len=S)

    out = pl.pallas_call(
        kern,
        out_shape=jax.ShapeDtypeStruct((B, S_pad, Cp), jnp.float32),
        grid=(B, depth),
        in_specs=in_specs,
        # constant block index across the depth axis -> output stays VMEM
        # resident; written once on the last layer step per sample
        out_specs=pl.BlockSpec((None, S_pad, Cp), lambda b, l: (b, 0, 0)),
        scratch_shapes=[pltpu.VMEM((S_pad, dim), jnp.float32)],  # residual stream
        compiler_params=pltpu.CompilerParams(
            dimension_semantics=("parallel", "arbitrary"),
            vmem_limit_bytes=48 * 1024 * 1024),
    )(*inputs)
    return out[:, :S, :C]


def init_params(key, *, in_channel, dim, num_heads, image_size,
                patch_size, num_classes, depth):
    del num_heads
    keys = iter(jax.random.split(key, 64))

    def nrm(shape, scale=0.02):
        return (scale * jax.random.normal(next(keys), shape)).astype(jnp.float32)

    num_patches = (image_size // patch_size) ** 2
    K = in_channel * patch_size * patch_size
    hidden = 4 * dim

    return {
        # conv weight [D, C, p, p] flattened & transposed -> [C*p*p, D]
        'conv_w': nrm((K, dim)),
        'conv_b': nrm((1, dim)),
        'cls_token': nrm((1, 1, dim)),
        'pos_embed': nrm((1, num_patches + 1, dim)),
        'norm_w': jnp.ones((1, dim), jnp.float32),
        'norm_b': jnp.zeros((1, dim), jnp.float32),
        'head_w': nrm((dim, num_classes)),
        'head_b': nrm((1, num_classes)),
        # per-layer weights stacked on a depth axis (streamed per grid step)
        'ln_w': jnp.ones((depth, 1, dim), jnp.float32),
        'ln_b': jnp.zeros((depth, 1, dim), jnp.float32),
        'qkv_w': nrm((depth, dim, 3 * dim)),
        'qkv_b': nrm((depth, 1, 3 * dim)),
        'proj_w': nrm((depth, dim, dim)),
        'proj_b': nrm((depth, 1, dim)),
        'fc1_w': nrm((depth, dim, hidden)),
        'fc1_b': nrm((depth, 1, hidden)),
        'fc2_w': nrm((depth, hidden, dim)),
        'fc2_b': nrm((depth, 1, dim)),
    }


if __name__ == "__main__":
    cfg = dict(in_channel=3, dim=32, num_heads=4, image_size=16,
               patch_size=4, num_classes=10, depth=2)
    key = jax.random.PRNGKey(0)
    pkey, xkey = jax.random.split(key)
    params = init_params(pkey, **cfg)

    B = 2
    x = jax.random.normal(
        xkey, (B, cfg['in_channel'], cfg['image_size'], cfg['image_size']),
        dtype=jnp.float32)

    out = vision_model_forward(x, params, cfg)
    out = jax.block_until_ready(out)

    num_patches = (cfg['image_size'] // cfg['patch_size']) ** 2
    assert out.shape == (B, num_patches + 1, cfg['num_classes']), out.shape
    assert jnp.all(jnp.isfinite(out))
    print("KERNEL_OK")
</pallas_src>

<mosaic_0001>
module attributes {stable_mosaic.version = 11 : i64} {
  func.func @vit_forward_kernel(%arg0: i32, %arg1: i32, %arg2: memref<1x16x48xbf16, #tpu.memory_space<vmem>>, %arg3: memref<48x32xbf16, #tpu.memory_space<vmem>>, %arg4: memref<1x32xf32, #tpu.memory_space<vmem>>, %arg5: memref<1x32xf32, #tpu.memory_space<vmem>>, %arg6: memref<24x32xf32, #tpu.memory_space<vmem>>, %arg7: memref<1x1x32xf32, #tpu.memory_space<vmem>>, %arg8: memref<1x1x32xf32, #tpu.memory_space<vmem>>, %arg9: memref<1x32x96xbf16, #tpu.memory_space<vmem>>, %arg10: memref<1x1x96xf32, #tpu.memory_space<vmem>>, %arg11: memref<1x32x32xbf16, #tpu.memory_space<vmem>>, %arg12: memref<1x1x32xf32, #tpu.memory_space<vmem>>, %arg13: memref<1x32x128xbf16, #tpu.memory_space<vmem>>, %arg14: memref<1x1x128xf32, #tpu.memory_space<vmem>>, %arg15: memref<1x128x32xbf16, #tpu.memory_space<vmem>>, %arg16: memref<1x1x32xf32, #tpu.memory_space<vmem>>, %arg17: memref<1x32xf32, #tpu.memory_space<vmem>>, %arg18: memref<1x32xf32, #tpu.memory_space<vmem>>, %arg19: memref<32x128xbf16, #tpu.memory_space<vmem>>, %arg20: memref<1x128xf32, #tpu.memory_space<vmem>>, %arg21: memref<1x24x128xf32, #tpu.memory_space<vmem>>, %arg22: memref<24x32xf32, #tpu.memory_space<vmem>>) attributes {dimension_semantics = [#tpu.dimension_semantics<parallel>, #tpu.dimension_semantics<arbitrary>], iteration_bounds = array<i64: 2, 2>, scalar_prefetch = 0 : i64, scratch_operands = 1 : i64, tpu.core_type = #tpu.core_type<tc>, window_params = [{transform_indices = @transform_0, window_bounds = array<i64: 1, 16, 48>}, {pipeline_mode = #tpu.pipeline_mode<synchronous>, transform_indices = @transform_1, window_bounds = array<i64: 48, 32>}, {pipeline_mode = #tpu.pipeline_mode<synchronous>, transform_indices = @transform_2, window_bounds = array<i64: 1, 32>}, {pipeline_mode = #tpu.pipeline_mode<synchronous>, transform_indices = @transform_3, window_bounds = array<i64: 1, 32>}, {pipeline_mode = #tpu.pipeline_mode<synchronous>, transform_indices = @transform_4, window_bounds = array<i64: 24, 32>}, {transform_indices = @transform_5, window_bounds = array<i64: 1, 1, 32>}, {transform_indices = @transform_6, window_bounds = array<i64: 1, 1, 32>}, {transform_indices = @transform_7, window_bounds = array<i64: 1, 32, 96>}, {transform_indices = @transform_8, window_bounds = array<i64: 1, 1, 96>}, {transform_indices = @transform_9, window_bounds = array<i64: 1, 32, 32>}, {transform_indices = @transform_10, window_bounds = array<i64: 1, 1, 32>}, {transform_indices = @transform_11, window_bounds = array<i64: 1, 32, 128>}, {transform_indices = @transform_12, window_bounds = array<i64: 1, 1, 128>}, {transform_indices = @transform_13, window_bounds = array<i64: 1, 128, 32>}, {transform_indices = @transform_14, window_bounds = array<i64: 1, 1, 32>}, {pipeline_mode = #tpu.pipeline_mode<synchronous>, transform_indices = @transform_15, window_bounds = array<i64: 1, 32>}, {pipeline_mode = #tpu.pipeline_mode<synchronous>, transform_indices = @transform_16, window_bounds = array<i64: 1, 32>}, {pipeline_mode = #tpu.pipeline_mode<synchronous>, transform_indices = @transform_17, window_bounds = array<i64: 32, 128>}, {pipeline_mode = #tpu.pipeline_mode<synchronous>, transform_indices = @transform_18, window_bounds = array<i64: 1, 128>}, {transform_indices = @transform_19, window_bounds = array<i64: 1, 24, 128>}]} {
    %c0_i32 = arith.constant 0 : i32
    %0 = arith.cmpi eq, %arg1, %c0_i32 : i32
    %1 = arith.extui %0 : i1 to i32
    %c0_i32_0 = arith.constant 0 : i32
    %2 = arith.cmpi ne, %1, %c0_i32_0 : i32
    scf.if %2 {
      %c0_72 = arith.constant 0 : index
      %c0_73 = arith.constant 0 : index
      %c0_74 = arith.constant 0 : index
      %201 = vector.load %arg2[%c0_72, %c0_73, %c0_74] : memref<1x16x48xbf16, #tpu.memory_space<vmem>>, vector<1x16x48xbf16>
      %202 = vector.shape_cast %201 : vector<1x16x48xbf16> to vector<16x48xbf16>
      %c0_75 = arith.constant 0 : index
      %c0_76 = arith.constant 0 : index
      %203 = vector.load %arg3[%c0_75, %c0_76] : memref<48x32xbf16, #tpu.memory_space<vmem>>, vector<48x32xbf16>
      %cst_77 = arith.constant dense<0.000000e+00> : vector<16x32xf32>
      %204 = tpu.matmul %202, %203, %cst_77 {dimension_numbers = #tpu.dot_dimension_numbers<[1], [0], [0], [1], [0, 0, 1, 1], [], []>} : vector<16x48xbf16>, vector<48x32xbf16>, vector<16x32xf32> -> vector<16x32xf32>
      %c0_78 = arith.constant 0 : index
      %c0_79 = arith.constant 0 : index
      %205 = vector.load %arg4[%c0_78, %c0_79] : memref<1x32xf32, #tpu.memory_space<vmem>>, vector<1x32xf32>
      %206 = vector.broadcast %205 : vector<1x32xf32> to vector<16x32xf32>
      %207 = arith.addf %204, %206 : vector<16x32xf32>
      %c0_80 = arith.constant 0 : index
      %c0_81 = arith.constant 0 : index
      %208 = vector.load %arg22[%c0_80, %c0_81] : memref<24x32xf32, #tpu.memory_space<vmem>>, vector<16x32xf32>
      tpu.vector_store %arg22[%c0_80, %c0_81], %207 {strides = array<i32>} : memref<24x32xf32, #tpu.memory_space<vmem>>, vector<16x32xf32>,
      %c0_82 = arith.constant 0 : index
      %c0_83 = arith.constant 0 : index
      %209 = vector.load %arg5[%c0_82, %c0_83] : memref<1x32xf32, #tpu.memory_space<vmem>>, vector<1x32xf32>
      %c16 = arith.constant 16 : index
      %c0_84 = arith.constant 0 : index
      %210 = vector.load %arg22[%c16, %c0_84] : memref<24x32xf32, #tpu.memory_space<vmem>>, vector<1x32xf32>
      tpu.vector_store %arg22[%c16, %c0_84], %209 {strides = array<i32>} : memref<24x32xf32, #tpu.memory_space<vmem>>, vector<1x32xf32>,
      %cst_85 = arith.constant 0.000000e+00 : f32
      %211 = vector.broadcast %cst_85 : f32 to vector<7x32xf32>
      %c17 = arith.constant 17 : index
      %c0_86 = arith.constant 0 : index
      %212 = vector.load %arg22[%c17, %c0_86] : memref<24x32xf32, #tpu.memory_space<vmem>>, vector<7x32xf32>
      tpu.vector_store %arg22[%c17, %c0_86], %211 {strides = array<i32>} : memref<24x32xf32, #tpu.memory_space<vmem>>, vector<7x32xf32>,
      %c0_87 = arith.constant 0 : index
      %c0_88 = arith.constant 0 : index
      %213 = vector.load %arg22[%c0_87, %c0_88] : memref<24x32xf32, #tpu.memory_space<vmem>>, vector<24x32xf32>
      %c0_89 = arith.constant 0 : index
      %c0_90 = arith.constant 0 : index
      %214 = vector.load %arg6[%c0_89, %c0_90] : memref<24x32xf32, #tpu.memory_space<vmem>>, vector<24x32xf32>
      %215 = arith.addf %213, %214 : vector<24x32xf32>
      %c0_91 = arith.constant 0 : index
      %c0_92 = arith.constant 0 : index
      %216 = vector.load %arg22[%c0_91, %c0_92] : memref<24x32xf32, #tpu.memory_space<vmem>>, vector<24x32xf32>
      tpu.vector_store %arg22[%c0_91, %c0_92], %215 {strides = array<i32>} : memref<24x32xf32, #tpu.memory_space<vmem>>, vector<24x32xf32>,
    } else {
    }
    %3 = tpu.iota {dimensions = array<i32: 1>} : vector<1x24xi32>
    %c17_i32 = arith.constant 17 : i32
    %4 = vector.broadcast %c17_i32 : i32 to vector<1x24xi32>
    %5 = arith.cmpi slt, %3, %4 : vector<1x24xi32>
    %cst = arith.constant 0.000000e+00 : f32
    %cst_1 = arith.constant -1.000000e+30 : f32
    %6 = vector.broadcast %cst : f32 to vector<1x24xf32>
    %7 = vector.broadcast %cst_1 : f32 to vector<1x24xf32>
    %8 = arith.select %5, %6, %7 : vector<1x24xi1>, vector<1x24xf32>
    %c0 = arith.constant 0 : index
    %c0_2 = arith.constant 0 : index
    %c0_3 = arith.constant 0 : index
    %9 = vector.load %arg7[%c0, %c0_2, %c0_3] : memref<1x1x32xf32, #tpu.memory_space<vmem>>, vector<1x1x32xf32>
    %10 = vector.shape_cast %9 : vector<1x1x32xf32> to vector<1x32xf32>
    %c0_4 = arith.constant 0 : index
    %c0_5 = arith.constant 0 : index
    %c0_6 = arith.constant 0 : index
    %11 = vector.load %arg8[%c0_4, %c0_5, %c0_6] : memref<1x1x32xf32, #tpu.memory_space<vmem>>, vector<1x1x32xf32>
    %12 = vector.shape_cast %11 : vector<1x1x32xf32> to vector<1x32xf32>
    %c0_7 = arith.constant 0 : index
    %c0_8 = arith.constant 0 : index
    %13 = vector.load %arg22[%c0_7, %c0_8] : memref<24x32xf32, #tpu.memory_space<vmem>>, vector<24x32xf32>
    %cst_9 = arith.constant dense<0.000000e+00> : vector<24xf32>
    %14 = vector.multi_reduction <add>, %13, %cst_9 [1] : vector<24x32xf32> to vector<24xf32>
    %15 = vector.shape_cast %14 : vector<24xf32> to vector<24x1xf32>
    %cst_10 = arith.constant 3.200000e+01 : f32
    %16 = vector.broadcast %cst_10 : f32 to vector<24x1xf32>
    %17 = arith.divf %15, %16 : vector<24x1xf32>
    %18 = vector.broadcast %17 : vector<24x1xf32> to vector<24x32xf32>
    %19 = arith.subf %13, %18 : vector<24x32xf32>
    %20 = arith.mulf %19, %19 : vector<24x32xf32>
    %cst_11 = arith.constant dense<0.000000e+00> : vector<24xf32>
    %21 = vector.multi_reduction <add>, %20, %cst_11 [1] : vector<24x32xf32> to vector<24xf32>
    %22 = vector.shape_cast %21 : vector<24xf32> to vector<24x1xf32>
    %cst_12 = arith.constant 3.200000e+01 : f32
    %23 = vector.broadcast %cst_12 : f32 to vector<24x1xf32>
    %24 = arith.divf %22, %23 : vector<24x1xf32>
    %25 = vector.broadcast %17 : vector<24x1xf32> to vector<24x32xf32>
    %26 = arith.subf %13, %25 : vector<24x32xf32>
    %cst_13 = arith.constant 9.99999974E-6 : f32
    %27 = vector.broadcast %cst_13 : f32 to vector<24x1xf32>
    %28 = arith.addf %24, %27 : vector<24x1xf32>
    %29 = math.rsqrt %28 : vector<24x1xf32>
    %30 = vector.broadcast %29 : vector<24x1xf32> to vector<24x32xf32>
    %31 = arith.mulf %26, %30 : vector<24x32xf32>
    %32 = vector.broadcast %10 : vector<1x32xf32> to vector<24x32xf32>
    %33 = arith.mulf %31, %32 : vector<24x32xf32>
    %34 = vector.broadcast %12 : vector<1x32xf32> to vector<24x32xf32>
    %35 = arith.addf %33, %34 : vector<24x32xf32>
    %36 = arith.truncf %35 : vector<24x32xf32> to vector<24x32xbf16>
    %c0_14 = arith.constant 0 : index
    %c0_15 = arith.constant 0 : index
    %c0_16 = arith.constant 0 : index
    %37 = vector.load %arg9[%c0_14, %c0_15, %c0_16] : memref<1x32x96xbf16, #tpu.memory_space<vmem>>, vector<1x32x96xbf16>
    %38 = vector.shape_cast %37 : vector<1x32x96xbf16> to vector<32x96xbf16>
    %cst_17 = arith.constant dense<0.000000e+00> : vector<24x96xf32>
    %39 = tpu.matmul %36, %38, %cst_17 {dimension_numbers = #tpu.dot_dimension_numbers<[1], [0], [0], [1], [0, 0, 1, 1], [], []>} : vector<24x32xbf16>, vector<32x96xbf16>, vector<24x96xf32> -> vector<24x96xf32>
    %c0_18 = arith.constant 0 : index
    %c0_19 = arith.constant 0 : index
    %c0_20 = arith.constant 0 : index
    %40 = vector.load %arg10[%c0_18, %c0_19, %c0_20] : memref<1x1x96xf32, #tpu.memory_space<vmem>>, vector<1x1x96xf32>
    %41 = vector.shape_cast %40 : vector<1x1x96xf32> to vector<1x96xf32>
    %42 = vector.broadcast %41 : vector<1x96xf32> to vector<24x96xf32>
    %43 = arith.addf %39, %42 : vector<24x96xf32>
    %44 = vector.extract_strided_slice %43 {offsets = [0, 0], sizes = [24, 8], strides = [1, 1]} : vector<24x96xf32> to vector<24x8xf32>
    %45 = arith.truncf %44 : vector<24x8xf32> to vector<24x8xbf16>
    %46 = vector.extract_strided_slice %43 {offsets = [0, 32], sizes = [24, 8], strides = [1, 1]} : vector<24x96xf32> to vector<24x8xf32>
    %47 = arith.truncf %46 : vector<24x8xf32> to vector<24x8xbf16>
    %48 = vector.extract_strided_slice %43 {offsets = [0, 64], sizes = [24, 8], strides = [1, 1]} : vector<24x96xf32> to vector<24x8xf32>
    %49 = arith.truncf %48 : vector<24x8xf32> to vector<24x8xbf16>
    %50 = tpu.transpose %47, [1, 0] : vector<24x8xbf16> -> vector<8x24xbf16>
    %cst_21 = arith.constant dense<0.000000e+00> : vector<24x24xf32>
    %51 = tpu.matmul %45, %50, %cst_21 {dimension_numbers = #tpu.dot_dimension_numbers<[1], [0], [0], [1], [0, 0, 1, 1], [], []>} : vector<24x8xbf16>, vector<8x24xbf16>, vector<24x24xf32> -> vector<24x24xf32>
    %52 = vector.broadcast %8 : vector<1x24xf32> to vector<24x24xf32>
    %53 = arith.addf %51, %52 : vector<24x24xf32>
    %cst_22 = arith.constant dense<0xFF800000> : vector<24xf32>
    %54 = vector.multi_reduction <maximumf>, %53, %cst_22 [1] : vector<24x24xf32> to vector<24xf32>
    %55 = vector.shape_cast %54 : vector<24xf32> to vector<24x1xf32>
    %56 = vector.broadcast %55 : vector<24x1xf32> to vector<24x24xf32>
    %57 = arith.subf %53, %56 : vector<24x24xf32>
    %58 = math.exp %57 : vector<24x24xf32>
    %cst_23 = arith.constant dense<0.000000e+00> : vector<24xf32>
    %59 = vector.multi_reduction <add>, %58, %cst_23 [1] : vector<24x24xf32> to vector<24xf32>
    %60 = vector.shape_cast %59 : vector<24xf32> to vector<24x1xf32>
    %61 = tpu.reciprocal %60 {approx = true} : vector<24x1xf32> -> vector<24x1xf32>
    %62 = vector.broadcast %61 : vector<24x1xf32> to vector<24x24xf32>
    %63 = arith.mulf %58, %62 : vector<24x24xf32>
    %64 = arith.truncf %63 : vector<24x24xf32> to vector<24x24xbf16>
    %cst_24 = arith.constant dense<0.000000e+00> : vector<24x8xf32>
    %65 = tpu.matmul %64, %49, %cst_24 {dimension_numbers = #tpu.dot_dimension_numbers<[1], [0], [0], [1], [0, 0, 1, 1], [], []>} : vector<24x24xbf16>, vector<24x8xbf16>, vector<24x8xf32> -> vector<24x8xf32>
    %66 = vector.extract_strided_slice %43 {offsets = [0, 8], sizes = [24, 8], strides = [1, 1]} : vector<24x96xf32> to vector<24x8xf32>
    %67 = arith.truncf %66 : vector<24x8xf32> to vector<24x8xbf16>
    %68 = vector.extract_strided_slice %43 {offsets = [0, 40], sizes = [24, 8], strides = [1, 1]} : vector<24x96xf32> to vector<24x8xf32>
    %69 = arith.truncf %68 : vector<24x8xf32> to vector<24x8xbf16>
    %70 = vector.extract_strided_slice %43 {offsets = [0, 72], sizes = [24, 8], strides = [1, 1]} : vector<24x96xf32> to vector<24x8xf32>
    %71 = arith.truncf %70 : vector<24x8xf32> to vector<24x8xbf16>
    %72 = tpu.transpose %69, [1, 0] : vector<24x8xbf16> -> vector<8x24xbf16>
    %cst_25 = arith.constant dense<0.000000e+00> : vector<24x24xf32>
    %73 = tpu.matmul %67, %72, %cst_25 {dimension_numbers = #tpu.dot_dimension_numbers<[1], [0], [0], [1], [0, 0, 1, 1], [], []>} : vector<24x8xbf16>, vector<8x24xbf16>, vector<24x24xf32> -> vector<24x24xf32>
    %74 = vector.broadcast %8 : vector<1x24xf32> to vector<24x24xf32>
    %75 = arith.addf %73, %74 : vector<24x24xf32>
    %cst_26 = arith.constant dense<0xFF800000> : vector<24xf32>
    %76 = vector.multi_reduction <maximumf>, %75, %cst_26 [1] : vector<24x24xf32> to vector<24xf32>
    %77 = vector.shape_cast %76 : vector<24xf32> to vector<24x1xf32>
    %78 = vector.broadcast %77 : vector<24x1xf32> to vector<24x24xf32>
    %79 = arith.subf %75, %78 : vector<24x24xf32>
    %80 = math.exp %79 : vector<24x24xf32>
    %cst_27 = arith.constant dense<0.000000e+00> : vector<24xf32>
    %81 = vector.multi_reduction <add>, %80, %cst_27 [1] : vector<24x24xf32> to vector<24xf32>
    %82 = vector.shape_cast %81 : vector<24xf32> to vector<24x1xf32>
    %83 = tpu.reciprocal %82 {approx = true} : vector<24x1xf32> -> vector<24x1xf32>
    %84 = vector.broadcast %83 : vector<24x1xf32> to vector<24x24xf32>
    %85 = arith.mulf %80, %84 : vector<24x24xf32>
    %86 = arith.truncf %85 : vector<24x24xf32> to vector<24x24xbf16>
    %cst_28 = arith.constant dense<0.000000e+00> : vector<24x8xf32>
    %87 = tpu.matmul %86, %71, %cst_28 {dimension_numbers = #tpu.dot_dimension_numbers<[1], [0], [0], [1], [0, 0, 1, 1], [], []>} : vector<24x24xbf16>, vector<24x8xbf16>, vector<24x8xf32> -> vector<24x8xf32>
    %88 = vector.extract_strided_slice %43 {offsets = [0, 16], sizes = [24, 8], strides = [1, 1]} : vector<24x96xf32> to vector<24x8xf32>
    %89 = arith.truncf %88 : vector<24x8xf32> to vector<24x8xbf16>
    %90 = vector.extract_strided_slice %43 {offsets = [0, 48], sizes = [24, 8], strides = [1, 1]} : vector<24x96xf32> to vector<24x8xf32>
    %91 = arith.truncf %90 : vector<24x8xf32> to vector<24x8xbf16>
    %92 = vector.extract_strided_slice %43 {offsets = [0, 80], sizes = [24, 8], strides = [1, 1]} : vector<24x96xf32> to vector<24x8xf32>
    %93 = arith.truncf %92 : vector<24x8xf32> to vector<24x8xbf16>
    %94 = tpu.transpose %91, [1, 0] : vector<24x8xbf16> -> vector<8x24xbf16>
    %cst_29 = arith.constant dense<0.000000e+00> : vector<24x24xf32>
    %95 = tpu.matmul %89, %94, %cst_29 {dimension_numbers = #tpu.dot_dimension_numbers<[1], [0], [0], [1], [0, 0, 1, 1], [], []>} : vector<24x8xbf16>, vector<8x24xbf16>, vector<24x24xf32> -> vector<24x24xf32>
    %96 = vector.broadcast %8 : vector<1x24xf32> to vector<24x24xf32>
    %97 = arith.addf %95, %96 : vector<24x24xf32>
    %cst_30 = arith.constant dense<0xFF800000> : vector<24xf32>
    %98 = vector.multi_reduction <maximumf>, %97, %cst_30 [1] : vector<24x24xf32> to vector<24xf32>
    %99 = vector.shape_cast %98 : vector<24xf32> to vector<24x1xf32>
    %100 = vector.broadcast %99 : vector<24x1xf32> to vector<24x24xf32>
    %101 = arith.subf %97, %100 : vector<24x24xf32>
    %102 = math.exp %101 : vector<24x24xf32>
    %cst_31 = arith.constant dense<0.000000e+00> : vector<24xf32>
    %103 = vector.multi_reduction <add>, %102, %cst_31 [1] : vector<24x24xf32> to vector<24xf32>
    %104 = vector.shape_cast %103 : vector<24xf32> to vector<24x1xf32>
    %105 = tpu.reciprocal %104 {approx = true} : vector<24x1xf32> -> vector<24x1xf32>
    %106 = vector.broadcast %105 : vector<24x1xf32> to vector<24x24xf32>
    %107 = arith.mulf %102, %106 : vector<24x24xf32>
    %108 = arith.truncf %107 : vector<24x24xf32> to vector<24x24xbf16>
    %cst_32 = arith.constant dense<0.000000e+00> : vector<24x8xf32>
    %109 = tpu.matmul %108, %93, %cst_32 {dimension_numbers = #tpu.dot_dimension_numbers<[1], [0], [0], [1], [0, 0, 1, 1], [], []>} : vector<24x24xbf16>, vector<24x8xbf16>, vector<24x8xf32> -> vector<24x8xf32>
    %110 = vector.extract_strided_slice %43 {offsets = [0, 24], sizes = [24, 8], strides = [1, 1]} : vector<24x96xf32> to vector<24x8xf32>
    %111 = arith.truncf %110 : vector<24x8xf32> to vector<24x8xbf16>
    %112 = vector.extract_strided_slice %43 {offsets = [0, 56], sizes = [24, 8], strides = [1, 1]} : vector<24x96xf32> to vector<24x8xf32>
    %113 = arith.truncf %112 : vector<24x8xf32> to vector<24x8xbf16>
    %114 = vector.extract_strided_slice %43 {offsets = [0, 88], sizes = [24, 8], strides = [1, 1]} : vector<24x96xf32> to vector<24x8xf32>
    %115 = arith.truncf %114 : vector<24x8xf32> to vector<24x8xbf16>
    %116 = tpu.transpose %113, [1, 0] : vector<24x8xbf16> -> vector<8x24xbf16>
    %cst_33 = arith.constant dense<0.000000e+00> : vector<24x24xf32>
    %117 = tpu.matmul %111, %116, %cst_33 {dimension_numbers = #tpu.dot_dimension_numbers<[1], [0], [0], [1], [0, 0, 1, 1], [], []>} : vector<24x8xbf16>, vector<8x24xbf16>, vector<24x24xf32> -> vector<24x24xf32>
    %118 = vector.broadcast %8 : vector<1x24xf32> to vector<24x24xf32>
    %119 = arith.addf %117, %118 : vector<24x24xf32>
    %cst_34 = arith.constant dense<0xFF800000> : vector<24xf32>
    %120 = vector.multi_reduction <maximumf>, %119, %cst_34 [1] : vector<24x24xf32> to vector<24xf32>
    %121 = vector.shape_cast %120 : vector<24xf32> to vector<24x1xf32>
    %122 = vector.broadcast %121 : vector<24x1xf32> to vector<24x24xf32>
    %123 = arith.subf %119, %122 : vector<24x24xf32>
    %124 = math.exp %123 : vector<24x24xf32>
    %cst_35 = arith.constant dense<0.000000e+00> : vector<24xf32>
    %125 = vector.multi_reduction <add>, %124, %cst_35 [1] : vector<24x24xf32> to vector<24xf32>
    %126 = vector.shape_cast %125 : vector<24xf32> to vector<24x1xf32>
    %127 = tpu.reciprocal %126 {approx = true} : vector<24x1xf32> -> vector<24x1xf32>
    %128 = vector.broadcast %127 : vector<24x1xf32> to vector<24x24xf32>
    %129 = arith.mulf %124, %128 : vector<24x24xf32>
    %130 = arith.truncf %129 : vector<24x24xf32> to vector<24x24xbf16>
    %cst_36 = arith.constant dense<0.000000e+00> : vector<24x8xf32>
    %131 = tpu.matmul %130, %115, %cst_36 {dimension_numbers = #tpu.dot_dimension_numbers<[1], [0], [0], [1], [0, 0, 1, 1], [], []>} : vector<24x24xbf16>, vector<24x8xbf16>, vector<24x8xf32> -> vector<24x8xf32>
    %132 = tpu.concatenate %65, %87, %109, %131 in 1 : vector<24x8xf32>, vector<24x8xf32>, vector<24x8xf32>, vector<24x8xf32> -> vector<24x32xf32>
    %133 = arith.truncf %132 : vector<24x32xf32> to vector<24x32xbf16>
    %c0_37 = arith.constant 0 : index
    %c0_38 = arith.constant 0 : index
    %c0_39 = arith.constant 0 : index
    %134 = vector.load %arg11[%c0_37, %c0_38, %c0_39] : memref<1x32x32xbf16, #tpu.memory_space<vmem>>, vector<1x32x32xbf16>
    %135 = vector.shape_cast %134 : vector<1x32x32xbf16> to vector<32x32xbf16>
    %cst_40 = arith.constant dense<0.000000e+00> : vector<24x32xf32>
    %136 = tpu.matmul %133, %135, %cst_40 {dimension_numbers = #tpu.dot_dimension_numbers<[1], [0], [0], [1], [0, 0, 1, 1], [], []>} : vector<24x32xbf16>, vector<32x32xbf16>, vector<24x32xf32> -> vector<24x32xf32>
    %137 = arith.addf %13, %136 : vector<24x32xf32>
    %c0_41 = arith.constant 0 : index
    %c0_42 = arith.constant 0 : index
    %c0_43 = arith.constant 0 : index
    %138 = vector.load %arg12[%c0_41, %c0_42, %c0_43] : memref<1x1x32xf32, #tpu.memory_space<vmem>>, vector<1x1x32xf32>
    %139 = vector.shape_cast %138 : vector<1x1x32xf32> to vector<1x32xf32>
    %140 = vector.broadcast %139 : vector<1x32xf32> to vector<24x32xf32>
    %141 = arith.addf %137, %140 : vector<24x32xf32>
    %cst_44 = arith.constant dense<0.000000e+00> : vector<24xf32>
    %142 = vector.multi_reduction <add>, %141, %cst_44 [1] : vector<24x32xf32> to vector<24xf32>
    %143 = vector.shape_cast %142 : vector<24xf32> to vector<24x1xf32>
    %cst_45 = arith.constant 3.200000e+01 : f32
    %144 = vector.broadcast %cst_45 : f32 to vector<24x1xf32>
    %145 = arith.divf %143, %144 : vector<24x1xf32>
    %146 = vector.broadcast %145 : vector<24x1xf32> to vector<24x32xf32>
    %147 = arith.subf %141, %146 : vector<24x32xf32>
    %148 = arith.mulf %147, %147 : vector<24x32xf32>
    %cst_46 = arith.constant dense<0.000000e+00> : vector<24xf32>
    %149 = vector.multi_reduction <add>, %148, %cst_46 [1] : vector<24x32xf32> to vector<24xf32>
    %150 = vector.shape_cast %149 : vector<24xf32> to vector<24x1xf32>
    %cst_47 = arith.constant 3.200000e+01 : f32
    %151 = vector.broadcast %cst_47 : f32 to vector<24x1xf32>
    %152 = arith.divf %150, %151 : vector<24x1xf32>
    %153 = vector.broadcast %145 : vector<24x1xf32> to vector<24x32xf32>
    %154 = arith.subf %141, %153 : vector<24x32xf32>
    %cst_48 = arith.constant 9.99999974E-6 : f32
    %155 = vector.broadcast %cst_48 : f32 to vector<24x1xf32>
    %156 = arith.addf %152, %155 : vector<24x1xf32>
    %157 = math.rsqrt %156 : vector<24x1xf32>
    %158 = vector.broadcast %157 : vector<24x1xf32> to vector<24x32xf32>
    %159 = arith.mulf %154, %158 : vector<24x32xf32>
    %160 = vector.broadcast %10 : vector<1x32xf32> to vector<24x32xf32>
    %161 = arith.mulf %159, %160 : vector<24x32xf32>
    %162 = vector.broadcast %12 : vector<1x32xf32> to vector<24x32xf32>
    %163 = arith.addf %161, %162 : vector<24x32xf32>
    %164 = arith.truncf %163 : vector<24x32xf32> to vector<24x32xbf16>
    %c0_49 = arith.constant 0 : index
    %c0_50 = arith.constant 0 : index
    %c0_51 = arith.constant 0 : index
    %165 = vector.load %arg13[%c0_49, %c0_50, %c0_51] : memref<1x32x128xbf16, #tpu.memory_space<vmem>>, vector<1x32x128xbf16>
    %166 = vector.shape_cast %165 : vector<1x32x128xbf16> to vector<32x128xbf16>
    %cst_52 = arith.constant dense<0.000000e+00> : vector<24x128xf32>
    %167 = tpu.matmul %164, %166, %cst_52 {dimension_numbers = #tpu.dot_dimension_numbers<[1], [0], [0], [1], [0, 0, 1, 1], [], []>} : vector<24x32xbf16>, vector<32x128xbf16>, vector<24x128xf32> -> vector<24x128xf32>
    %c0_53 = arith.constant 0 : index
    %c0_54 = arith.constant 0 : index
    %c0_55 = arith.constant 0 : index
    %168 = vector.load %arg14[%c0_53, %c0_54, %c0_55] : memref<1x1x128xf32, #tpu.memory_space<vmem>>, vector<1x1x128xf32>
    %169 = vector.shape_cast %168 : vector<1x1x128xf32> to vector<1x128xf32>
    %170 = vector.broadcast %169 : vector<1x128xf32> to vector<24x128xf32>
    %171 = arith.addf %167, %170 : vector<24x128xf32>
    %cst_56 = arith.constant 5.000000e-01 : f32
    %172 = vector.broadcast %cst_56 : f32 to vector<24x128xf32>
    %173 = arith.mulf %172, %171 : vector<24x128xf32>
    %cst_57 = arith.constant 0.707106769 : f32
    %174 = vector.broadcast %cst_57 : f32 to vector<24x128xf32>
    %175 = arith.mulf %171, %174 : vector<24x128xf32>
    %176 = math.erf %175 : vector<24x128xf32>
    %cst_58 = arith.constant 1.000000e+00 : f32
    %177 = vector.broadcast %cst_58 : f32 to vector<24x128xf32>
    %178 = arith.addf %177, %176 : vector<24x128xf32>
    %179 = arith.mulf %173, %178 : vector<24x128xf32>
    %180 = arith.truncf %179 : vector<24x128xf32> to vector<24x128xbf16>
    %c0_59 = arith.constant 0 : index
    %c0_60 = arith.constant 0 : index
    %c0_61 = arith.constant 0 : index
    %181 = vector.load %arg15[%c0_59, %c0_60, %c0_61] : memref<1x128x32xbf16, #tpu.memory_space<vmem>>, vector<1x128x32xbf16>
    %182 = vector.shape_cast %181 : vector<1x128x32xbf16> to vector<128x32xbf16>
    %cst_62 = arith.constant dense<0.000000e+00> : vector<24x32xf32>
    %183 = tpu.matmul %180, %182, %cst_62 {dimension_numbers = #tpu.dot_dimension_numbers<[1], [0], [0], [1], [0, 0, 1, 1], [], []>} : vector<24x128xbf16>, vector<128x32xbf16>, vector<24x32xf32> -> vector<24x32xf32>
    %c0_63 = arith.constant 0 : index
    %c0_64 = arith.constant 0 : index
    %c0_65 = arith.constant 0 : index
    %184 = vector.load %arg16[%c0_63, %c0_64, %c0_65] : memref<1x1x32xf32, #tpu.memory_space<vmem>>, vector<1x1x32xf32>
    %185 = vector.shape_cast %184 : vector<1x1x32xf32> to vector<1x32xf32>
    %186 = vector.broadcast %185 : vector<1x32xf32> to vector<24x32xf32>
    %187 = arith.addf %183, %186 : vector<24x32xf32>
    %cst_66 = arith.constant 5.000000e-01 : f32
    %188 = vector.broadcast %cst_66 : f32 to vector<24x32xf32>
    %189 = arith.mulf %188, %187 : vector<24x32xf32>
    %cst_67 = arith.constant 0.707106769 : f32
    %190 = vector.broadcast %cst_67 : f32 to vector<24x32xf32>
    %191 = arith.mulf %187, %190 : vector<24x32xf32>
    %192 = math.erf %191 : vector<24x32xf32>
    %cst_68 = arith.constant 1.000000e+00 : f32
    %193 = vector.broadcast %cst_68 : f32 to vector<24x32xf32>
    %194 = arith.addf %193, %192 : vector<24x32xf32>
    %195 = arith.mulf %189, %194 : vector<24x32xf32>
    %196 = arith.addf %141, %195 : vector<24x32xf32>
    %c0_69 = arith.constant 0 : index
    %c0_70 = arith.constant 0 : index
    %197 = vector.load %arg22[%c0_69, %c0_70] : memref<24x32xf32, #tpu.memory_space<vmem>>, vector<24x32xf32>
    tpu.vector_store %arg22[%c0_69, %c0_70], %196 {strides = array<i32>} : memref<24x32xf32, #tpu.memory_space<vmem>>, vector<24x32xf32>,
    %c1_i32 = arith.constant 1 : i32
    %198 = arith.cmpi eq, %arg1, %c1_i32 : i32
    %199 = arith.extui %198 : i1 to i32
    %c0_i32_71 = arith.constant 0 : i32
    %200 = arith.cmpi ne, %199, %c0_i32_71 : i32
    scf.if %200 {
      %c0_72 = arith.constant 0 : index
      %c0_73 = arith.constant 0 : index
      %201 = vector.load %arg17[%c0_72, %c0_73] : memref<1x32xf32, #tpu.memory_space<vmem>>, vector<1x32xf32>
      %c0_74 = arith.constant 0 : index
      %c0_75 = arith.constant 0 : index
      %202 = vector.load %arg18[%c0_74, %c0_75] : memref<1x32xf32, #tpu.memory_space<vmem>>, vector<1x32xf32>
      %cst_76 = arith.constant dense<0.000000e+00> : vector<24xf32>
      %203 = vector.multi_reduction <add>, %196, %cst_76 [1] : vector<24x32xf32> to vector<24xf32>
      %204 = vector.shape_cast %203 : vector<24xf32> to vector<24x1xf32>
      %cst_77 = arith.constant 3.200000e+01 : f32
      %205 = vector.broadcast %cst_77 : f32 to vector<24x1xf32>
      %206 = arith.divf %204, %205 : vector<24x1xf32>
      %207 = vector.broadcast %206 : vector<24x1xf32> to vector<24x32xf32>
      %208 = arith.subf %196, %207 : vector<24x32xf32>
      %209 = arith.mulf %208, %208 : vector<24x32xf32>
      %cst_78 = arith.constant dense<0.000000e+00> : vector<24xf32>
      %210 = vector.multi_reduction <add>, %209, %cst_78 [1] : vector<24x32xf32> to vector<24xf32>
      %211 = vector.shape_cast %210 : vector<24xf32> to vector<24x1xf32>
      %cst_79 = arith.constant 3.200000e+01 : f32
      %212 = vector.broadcast %cst_79 : f32 to vector<24x1xf32>
      %213 = arith.divf %211, %212 : vector<24x1xf32>
      %214 = vector.broadcast %206 : vector<24x1xf32> to vector<24x32xf32>
      %215 = arith.subf %196, %214 : vector<24x32xf32>
      %cst_80 = arith.constant 9.99999974E-6 : f32
      %216 = vector.broadcast %cst_80 : f32 to vector<24x1xf32>
      %217 = arith.addf %213, %216 : vector<24x1xf32>
      %218 = math.rsqrt %217 : vector<24x1xf32>
      %219 = vector.broadcast %218 : vector<24x1xf32> to vector<24x32xf32>
      %220 = arith.mulf %215, %219 : vector<24x32xf32>
      %221 = vector.broadcast %201 : vector<1x32xf32> to vector<24x32xf32>
      %222 = arith.mulf %220, %221 : vector<24x32xf32>
      %223 = vector.broadcast %202 : vector<1x32xf32> to vector<24x32xf32>
      %224 = arith.addf %222, %223 : vector<24x32xf32>
      %225 = arith.truncf %224 : vector<24x32xf32> to vector<24x32xbf16>
      %c0_81 = arith.constant 0 : index
      %c0_82 = arith.constant 0 : index
      %226 = vector.load %arg19[%c0_81, %c0_82] : memref<32x128xbf16, #tpu.memory_space<vmem>>, vector<32x128xbf16>
      %cst_83 = arith.constant dense<0.000000e+00> : vector<24x128xf32>
      %227 = tpu.matmul %225, %226, %cst_83 {dimension_numbers = #tpu.dot_dimension_numbers<[1], [0], [0], [1], [0, 0, 1, 1], [], []>} : vector<24x32xbf16>, vector<32x128xbf16>, vector<24x128xf32> -> vector<24x128xf32>
      %c0_84 = arith.constant 0 : index
      %c0_85 = arith.constant 0 : index
      %228 = vector.load %arg20[%c0_84, %c0_85] : memref<1x128xf32, #tpu.memory_space<vmem>>, vector<1x128xf32>
      %229 = vector.broadcast %228 : vector<1x128xf32> to vector<24x128xf32>
      %230 = arith.addf %227, %229 : vector<24x128xf32>
      %c0_86 = arith.constant 0 : index
      %c0_87 = arith.constant 0 : index
      %c0_88 = arith.constant 0 : index
      %231 = vector.load %arg21[%c0_86, %c0_87, %c0_88] : memref<1x24x128xf32, #tpu.memory_space<vmem>>, vector<1x24x128xf32>
      %232 = vector.shape_cast %231 : vector<1x24x128xf32> to vector<24x128xf32>
      %233 = vector.shape_cast %230 : vector<24x128xf32> to vector<1x24x128xf32>
      tpu.vector_store %arg21[%c0_86, %c0_87, %c0_88], %233 {strides = array<i32>} : memref<1x24x128xf32, #tpu.memory_space<vmem>>, vector<1x24x128xf32>,
    } else {
    }
    return
  }
  func.func @transform_0(%arg0: i32, %arg1: i32) -> (i32, i32, i32) {
    %c0_i32 = arith.constant 0 : i32
    %c0_i32_0 = arith.constant 0 : i32
    %c0_i32_1 = arith.constant 0 : i32
    return %arg0, %c0_i32, %c0_i32_0 : i32, i32, i32
  }
  func.func @transform_1(%arg0: i32, %arg1: i32) -> (i32, i32) {
    %c0_i32 = arith.constant 0 : i32
    %c0_i32_0 = arith.constant 0 : i32
    %c0_i32_1 = arith.constant 0 : i32
    return %c0_i32, %c0_i32_0 : i32, i32
  }
  func.func @transform_2(%arg0: i32, %arg1: i32) -> (i32, i32) {
    %c0_i32 = arith.constant 0 : i32
    %c0_i32_0 = arith.constant 0 : i32
    %c0_i32_1 = arith.constant 0 : i32
    return %c0_i32, %c0_i32_0 : i32, i32
  }
  func.func @transform_3(%arg0: i32, %arg1: i32) -> (i32, i32) {
    %c0_i32 = arith.constant 0 : i32
    %c0_i32_0 = arith.constant 0 : i32
    %c0_i32_1 = arith.constant 0 : i32
    return %c0_i32, %c0_i32_0 : i32, i32
  }
  func.func @transform_4(%arg0: i32, %arg1: i32) -> (i32, i32) {
    %c0_i32 = arith.constant 0 : i32
    %c0_i32_0 = arith.constant 0 : i32
    %c0_i32_1 = arith.constant 0 : i32
    return %c0_i32, %c0_i32_0 : i32, i32
  }
  func.func @transform_5(%arg0: i32, %arg1: i32) -> (i32, i32, i32) {
    %c0_i32 = arith.constant 0 : i32
    %c0_i32_0 = arith.constant 0 : i32
    %c0_i32_1 = arith.constant 0 : i32
    return %arg1, %c0_i32, %c0_i32_0 : i32, i32, i32
  }
  func.func @transform_6(%arg0: i32, %arg1: i32) -> (i32, i32, i32) {
    %c0_i32 = arith.constant 0 : i32
    %c0_i32_0 = arith.constant 0 : i32
    %c0_i32_1 = arith.constant 0 : i32
    return %arg1, %c0_i32, %c0_i32_0 : i32, i32, i32
  }
  func.func @transform_7(%arg0: i32, %arg1: i32) -> (i32, i32, i32) {
    %c0_i32 = arith.constant 0 : i32
    %c0_i32_0 = arith.constant 0 : i32
    %c0_i32_1 = arith.constant 0 : i32
    return %arg1, %c0_i32, %c0_i32_0 : i32, i32, i32
  }
  func.func @transform_8(%arg0: i32, %arg1: i32) -> (i32, i32, i32) {
    %c0_i32 = arith.constant 0 : i32
    %c0_i32_0 = arith.constant 0 : i32
    %c0_i32_1 = arith.constant 0 : i32
    return %arg1, %c0_i32, %c0_i32_0 : i32, i32, i32
  }
  func.func @transform_9(%arg0: i32, %arg1: i32) -> (i32, i32, i32) {
    %c0_i32 = arith.constant 0 : i32
    %c0_i32_0 = arith.constant 0 : i32
    %c0_i32_1 = arith.constant 0 : i32
    return %arg1, %c0_i32, %c0_i32_0 : i32, i32, i32
  }
  func.func @transform_10(%arg0: i32, %arg1: i32) -> (i32, i32, i32) {
    %c0_i32 = arith.constant 0 : i32
    %c0_i32_0 = arith.constant 0 : i32
    %c0_i32_1 = arith.constant 0 : i32
    return %arg1, %c0_i32, %c0_i32_0 : i32, i32, i32
  }
  func.func @transform_11(%arg0: i32, %arg1: i32) -> (i32, i32, i32) {
    %c0_i32 = arith.constant 0 : i32
    %c0_i32_0 = arith.constant 0 : i32
    %c0_i32_1 = arith.constant 0 : i32
    return %arg1, %c0_i32, %c0_i32_0 : i32, i32, i32
  }
  func.func @transform_12(%arg0: i32, %arg1: i32) -> (i32, i32, i32) {
    %c0_i32 = arith.constant 0 : i32
    %c0_i32_0 = arith.constant 0 : i32
    %c0_i32_1 = arith.constant 0 : i32
    return %arg1, %c0_i32, %c0_i32_0 : i32, i32, i32
  }
  func.func @transform_13(%arg0: i32, %arg1: i32) -> (i32, i32, i32) {
    %c0_i32 = arith.constant 0 : i32
    %c0_i32_0 = arith.constant 0 : i32
    %c0_i32_1 = arith.constant 0 : i32
    return %arg1, %c0_i32, %c0_i32_0 : i32, i32, i32
  }
  func.func @transform_14(%arg0: i32, %arg1: i32) -> (i32, i32, i32) {
    %c0_i32 = arith.constant 0 : i32
    %c0_i32_0 = arith.constant 0 : i32
    %c0_i32_1 = arith.constant 0 : i32
    return %arg1, %c0_i32, %c0_i32_0 : i32, i32, i32
  }
  func.func @transform_15(%arg0: i32, %arg1: i32) -> (i32, i32) {
    %c0_i32 = arith.constant 0 : i32
    %c0_i32_0 = arith.constant 0 : i32
    %c0_i32_1 = arith.constant 0 : i32
    return %c0_i32, %c0_i32_0 : i32, i32
  }
  func.func @transform_16(%arg0: i32, %arg1: i32) -> (i32, i32) {
    %c0_i32 = arith.constant 0 : i32
    %c0_i32_0 = arith.constant 0 : i32
    %c0_i32_1 = arith.constant 0 : i32
    return %c0_i32, %c0_i32_0 : i32, i32
  }
  func.func @transform_17(%arg0: i32, %arg1: i32) -> (i32, i32) {
    %c0_i32 = arith.constant 0 : i32
    %c0_i32_0 = arith.constant 0 : i32
    %c0_i32_1 = arith.constant 0 : i32
    return %c0_i32, %c0_i32_0 : i32, i32
  }
  func.func @transform_18(%arg0: i32, %arg1: i32) -> (i32, i32) {
    %c0_i32 = arith.constant 0 : i32
    %c0_i32_0 = arith.constant 0 : i32
    %c0_i32_1 = arith.constant 0 : i32
    return %c0_i32, %c0_i32_0 : i32, i32
  }
  func.func @transform_19(%arg0: i32, %arg1: i32) -> (i32, i32, i32) {
    %c0_i32 = arith.constant 0 : i32
    %c0_i32_0 = arith.constant 0 : i32
    %c0_i32_1 = arith.constant 0 : i32
    return %arg0, %c0_i32, %c0_i32_0 : i32, i32, i32
  }
}

</mosaic_0001>

<llo_original>
// kernel: tpu_custom_call.1
$region0: #{tpu_custom_call.1}
  #allocation0 [shape = 'u32[]', space=smem, size = 0x4, offset = 0x4, fixed_abs, tag = 'smem constant byte address 0x4 - core index']
  #allocation1 [shape = 'u32[72,128]{1,0:T(1,128)}', space=vmem, size = 0x9000, scoped, tag = 'internal scratch']
  #allocation2 [shape = 'f32[24,32]{1,0:T(8,128)}', space=vmem, size = 0x3000, scoped, tag = 'scratch operand']
  %s0 = inlined_call_operand.vmem [shape: bf16[2,16,48], index: 0, kind: input, shape index: {}]
  %s1 = inlined_call_operand.vmem [shape: bf16[48,32], index: 1, kind: input, shape index: {}]
  %s2 = inlined_call_operand.vmem [shape: f32[1,32], index: 2, kind: input, shape index: {}]
  %s3 = inlined_call_operand.vmem [shape: f32[1,32], index: 3, kind: input, shape index: {}]
  %s4 = inlined_call_operand.vmem [shape: f32[24,32], index: 4, kind: input, shape index: {}]
  %s5 = inlined_call_operand.vmem [shape: f32[2,1,32], index: 5, kind: input, shape index: {}]
  %s6 = inlined_call_operand.vmem [shape: f32[2,1,32], index: 6, kind: input, shape index: {}]
  %s7 = inlined_call_operand.vmem [shape: bf16[2,32,96], index: 7, kind: input, shape index: {}]
  %s8 = inlined_call_operand.vmem [shape: f32[2,1,96], index: 8, kind: input, shape index: {}]
  %s9 = inlined_call_operand.vmem [shape: bf16[2,32,32], index: 9, kind: input, shape index: {}]
  %s10 = inlined_call_operand.vmem [shape: f32[2,1,32], index: 10, kind: input, shape index: {}]
  %s11 = inlined_call_operand.vmem [shape: bf16[2,32,128], index: 11, kind: input, shape index: {}]
  %s12 = inlined_call_operand.vmem [shape: f32[2,1,128], index: 12, kind: input, shape index: {}]
  %s13 = inlined_call_operand.vmem [shape: bf16[2,128,32], index: 13, kind: input, shape index: {}]
  %s14 = inlined_call_operand.vmem [shape: f32[2,1,32], index: 14, kind: input, shape index: {}]
  %s15 = inlined_call_operand.vmem [shape: f32[1,32], index: 15, kind: input, shape index: {}]
  %s16 = inlined_call_operand.vmem [shape: f32[1,32], index: 16, kind: input, shape index: {}]
  %s17 = inlined_call_operand.vmem [shape: bf16[32,128], index: 17, kind: input, shape index: {}]
  %s18 = inlined_call_operand.vmem [shape: f32[1,128], index: 18, kind: input, shape index: {}]
  %s19 = inlined_call_operand.hbm [shape: f32[2,24,128], index: 19, kind: output, shape index: {}]
  %s20 = sld [smem:[#allocation0]]
  $region117: #{tpu_custom_call.1} parent=0
    _
  %s22 = ssub.s32 1, %s20
  %s23 = scalar_select 0, %s22, %s20
  $region1: #{tpu_custom_call.1} parent=0
    #allocation3 [shape = 'u8[24576]{0}', space=vmem, size = 0x6000, scoped, tag = 'output window, operand 0']
    #allocation4 [shape = 's32[2]{0}', space=sflag, size = 0x8, scoped, tag = 'scoped memory for tpu_custom_call.1']
    %24 = vsyncpa [#allocation4], 0
    %s25 = scalar_lea.sflag [#allocation4], 1
    %26 = vsyncpa %s25, 0
    loop: start=0, step=1, limit=6
    $region2: #{tpu_custom_call.1} parent=1 // loop_pre_header
      _
    $region3: #{tpu_custom_call.1} parent=1 // loop_header
      %s28 = sphi 0, %s32
      %p29 = scmp.ge.s32.totalorder %s28, 6
      %s35 = sphi 0, %s47
      %s36 = sphi 0, %s43
      %s37 = sphi 0, %s35
      %s38 = sphi 0, %s36
      %s39 = sphi 0, %s37
      %s40 = sphi 0, %s38
      %s50 = sphi 0, %s52
      %s53 = sphi 0, %s50
      %s54 = sphi 0, %s53
      %s70 = sphi 0, %s54
      %s74 = sphi 0, %s74
      %s76 = sphi 0, %s74
      %s77 = sphi 0, %s76
      %s91 = sphi 0, %s77
      %s95 = sphi 0, %s95
      %s97 = sphi 0, %s95
      %s98 = sphi 0, %s97
      %s112 = sphi 0, %s98
      %s116 = sphi 0, %s116
      %s118 = sphi 0, %s116
      %s119 = sphi 0, %s118
      %s133 = sphi 0, %s119
      %s137 = sphi 0, %s137
      %s139 = sphi 0, %s137
      %s140 = sphi 0, %s139
      %s154 = sphi 0, %s140
      %s160 = sphi 0, %s162
      %s163 = sphi 0, %s160
      %s164 = sphi 0, %s163
      %s180 = sphi 0, %s164
      %s186 = sphi 0, %s188
      %s189 = sphi 0, %s186
      %s190 = sphi 0, %s189
      %s206 = sphi 0, %s190
      %s212 = sphi 0, %s214
      %s215 = sphi 0, %s212
      %s216 = sphi 0, %s215
      %s232 = sphi 0, %s216
      %s238 = sphi 0, %s240
      %s241 = sphi 0, %s238
      %s242 = sphi 0, %s241
      %s258 = sphi 0, %s242
      %s264 = sphi 0, %s266
      %s267 = sphi 0, %s264
      %s268 = sphi 0, %s267
      %s284 = sphi 0, %s268
      %s290 = sphi 0, %s292
      %s293 = sphi 0, %s290
      %s294 = sphi 0, %s293
      %s310 = sphi 0, %s294
      %s316 = sphi 0, %s318
      %s319 = sphi 0, %s316
      %s320 = sphi 0, %s319
      %s336 = sphi 0, %s320
      %s342 = sphi 0, %s344
      %s345 = sphi 0, %s342
      %s346 = sphi 0, %s345
      %s362 = sphi 0, %s346
      %s368 = sphi 0, %s370
      %s371 = sphi 0, %s368
      %s372 = sphi 0, %s371
      %s388 = sphi 0, %s372
      %s394 = sphi 0, %s396
      %s397 = sphi 0, %s394
      %s398 = sphi 0, %s397
      %s414 = sphi 0, %s398
      %s418 = sphi 0, %s418
      %s420 = sphi 0, %s418
      %s421 = sphi 0, %s420
      %s435 = sphi 0, %s421
      %s439 = sphi 0, %s439
      %s441 = sphi 0, %s439
      %s442 = sphi 0, %s441
      %s456 = sphi 0, %s442
      %s460 = sphi 0, %s460
      %s462 = sphi 0, %s460
      %s463 = sphi 0, %s462
      %s477 = sphi 0, %s463
      %s481 = sphi 0, %s481
      %s483 = sphi 0, %s481
      %s484 = sphi 0, %s483
      %s498 = sphi 0, %s484
      %s504 = sphi 0, %s506
      %s507 = sphi 0, %s504
      %s508 = sphi 0, %s507
      %s524 = sphi 0, %s508
    $region4: #{tpu_custom_call.1} parent=1 // loop_header_branch
      %31 = sbr.rel (%p29) target = $region8
    $region5: #{tpu_custom_call.1} parent=1 // loop_body
      %s33 = ssub.s32 %s28, 1
      %s34 = ssub.s32 %s28, 2
      %s41 = sadd.s32 1, %s36
      %p42 = scmp.ge.s32.totalorder %s41, 2
      %s43 = scalar_select %p42, 0, %s41
      %s44 = sadd.s32 1, %s35
      %s45 = scalar_select %p42, %s44, %s35
      %p46 = scmp.ge.s32.totalorder %s45, 2
      %s47 = scalar_select %p46, 0, %s45
      %s48 = ssub.s32 %s35, %s47
      %p49 = scmp.eq.s32.totalorder %s48, 0
      %s51 = sadd.s32 %s50, 1
      %s52 = scalar_select %p49, %s50, %s51
      %p55 = pneg %p49
      %p56 = scmp.eq.s32.totalorder %s28, 3
      %p57 = por %p55, %p56
      %p58 = scmp.ne.s32.totalorder %s50, %s53
      %p59 = scmp.eq.s32.totalorder %s28, 0
      %p60 = por %p58, %p59
      %p61 = scmp.ne.s32.totalorder %s50, %s53
      %p62 = scmp.eq.s32.totalorder %s33, 3
      %p63 = por %p61, %p62
      %p64 = scmp.ne.s32.totalorder %s53, %s54
      %p65 = scmp.eq.s32.totalorder %s33, 0
      %p66 = por %p64, %p65
      %p67 = scmp.ne.s32.totalorder %s53, %s54
      %p68 = scmp.eq.s32.totalorder %s34, 3
      %p69 = por %p67, %p68
      %p71 = scmp.ne.s32.totalorder %s54, %s70
      %p72 = scmp.eq.s32.totalorder %s34, 0
      %p73 = por %p71, %p72
      %s75 = sadd.s32 %s74, 1
      %p78 = scmp.eq.s32.totalorder %s28, 3
      %p79 = scmp.ne.s32.totalorder %s74, %s76
      %p80 = scmp.eq.s32.totalorder %s28, 0
      %p81 = por %p79, %p80
      %p82 = scmp.ne.s32.totalorder %s74, %s76
      %p83 = scmp.eq.s32.totalorder %s33, 3
      %p84 = por %p82, %p83
      %p85 = scmp.ne.s32.totalorder %s76, %s77
      %p86 = scmp.eq.s32.totalorder %s33, 0
      %p87 = por %p85, %p86
      %p88 = scmp.ne.s32.totalorder %s76, %s77
      %p89 = scmp.eq.s32.totalorder %s34, 3
      %p90 = por %p88, %p89
      %p92 = scmp.ne.s32.totalorder %s77, %s91
      %p93 = scmp.eq.s32.totalorder %s34, 0
      %p94 = por %p92, %p93
      %s96 = sadd.s32 %s95, 1
      %p99 = scmp.eq.s32.totalorder %s28, 3
      %p100 = scmp.ne.s32.totalorder %s95, %s97
      %p101 = scmp.eq.s32.totalorder %s28, 0
      %p102 = por %p100, %p101
      %p103 = scmp.ne.s32.totalorder %s95, %s97
      %p104 = scmp.eq.s32.totalorder %s33, 3
      %p105 = por %p103, %p104
      %p106 = scmp.ne.s32.totalorder %s97, %s98
      %p107 = scmp.eq.s32.totalorder %s33, 0
      %p108 = por %p106, %p107
      %p109 = scmp.ne.s32.totalorder %s97, %s98
      %p110 = scmp.eq.s32.totalorder %s34, 3
      %p111 = por %p109, %p110
      %p113 = scmp.ne.s32.totalorder %s98, %s112
      %p114 = scmp.eq.s32.totalorder %s34, 0
      %p115 = por %p113, %p114
      %s117 = sadd.s32 %s116, 1
      %p120 = scmp.eq.s32.totalorder %s28, 3
      %p121 = scmp.ne.s32.totalorder %s116, %s118
      %p122 = scmp.eq.s32.totalorder %s28, 0
      %p123 = por %p121, %p122
      %p124 = scmp.ne.s32.totalorder %s116, %s118
      %p125 = scmp.eq.s32.totalorder %s33, 3
      %p126 = por %p124, %p125
      %p127 = scmp.ne.s32.totalorder %s118, %s119
      %p128 = scmp.eq.s32.totalorder %s33, 0
      %p129 = por %p127, %p128
      %p130 = scmp.ne.s32.totalorder %s118, %s119
      %p131 = scmp.eq.s32.totalorder %s34, 3
      %p132 = por %p130, %p131
      %p134 = scmp.ne.s32.totalorder %s119, %s133
      %p135 = scmp.eq.s32.totalorder %s34, 0
      %p136 = por %p134, %p135
      %s138 = sadd.s32 %s137, 1
      %p141 = scmp.eq.s32.totalorder %s28, 3
      %p142 = scmp.ne.s32.totalorder %s137, %s139
      %p143 = scmp.eq.s32.totalorder %s28, 0
      %p144 = por %p142, %p143
      %p145 = scmp.ne.s32.totalorder %s137, %s139
      %p146 = scmp.eq.s32.totalorder %s33, 3
      %p147 = por %p145, %p146
      %p148 = scmp.ne.s32.totalorder %s139, %s140
      %p149 = scmp.eq.s32.totalorder %s33, 0
      %p150 = por %p148, %p149
      %p151 = scmp.ne.s32.totalorder %s139, %s140
      %p152 = scmp.eq.s32.totalorder %s34, 3
      %p153 = por %p151, %p152
      %p155 = scmp.ne.s32.totalorder %s140, %s154
      %p156 = scmp.eq.s32.totalorder %s34, 0
      %p157 = por %p155, %p156
      %s158 = ssub.s32 %s36, %s43
      %p159 = scmp.eq.s32.totalorder %s158, 0
      %s161 = sadd.s32 %s160, 1
      %s162 = scalar_select %p159, %s160, %s161
      %p165 = pneg %p159
      %p166 = scmp.eq.s32.totalorder %s28, 3
      %p167 = por %p165, %p166
      %p168 = scmp.ne.s32.totalorder %s160, %s163
      %p169 = scmp.eq.s32.totalorder %s28, 0
      %p170 = por %p168, %p169
      %p171 = scmp.ne.s32.totalorder %s160, %s163
      %p172 = scmp.eq.s32.totalorder %s33, 3
      %p173 = por %p171, %p172
      %p174 = scmp.ne.s32.totalorder %s163, %s164
      %p175 = scmp.eq.s32.totalorder %s33, 0
      %p176 = por %p174, %p175
      %p177 = scmp.ne.s32.totalorder %s163, %s164
      %p178 = scmp.eq.s32.totalorder %s34, 3
      %p179 = por %p177, %p178
      %p181 = scmp.ne.s32.totalorder %s164, %s180
      %p182 = scmp.eq.s32.totalorder %s34, 0
      %p183 = por %p181, %p182
      %s184 = ssub.s32 %s36, %s43
      %p185 = scmp.eq.s32.totalorder %s184, 0
      %s187 = sadd.s32 %s186, 1
      %s188 = scalar_select %p185, %s186, %s187
      %p191 = pneg %p185
      %p192 = scmp.eq.s32.totalorder %s28, 3
      %p193 = por %p191, %p192
      %p194 = scmp.ne.s32.totalorder %s186, %s189
      %p195 = scmp.eq.s32.totalorder %s28, 0
      %p196 = por %p194, %p195
      %p197 = scmp.ne.s32.totalorder %s186, %s189
      %p198 = scmp.eq.s32.totalorder %s33, 3
      %p199 = por %p197, %p198
      %p200 = scmp.ne.s32.totalorder %s189, %s190
      %p201 = scmp.eq.s32.totalorder %s33, 0
      %p202 = por %p200, %p201
      %p203 = scmp.ne.s32.totalorder %s189, %s190
      %p204 = scmp.eq.s32.totalorder %s34, 3
      %p205 = por %p203, %p204
      %p207 = scmp.ne.s32.totalorder %s190, %s206
      %p208 = scmp.eq.s32.totalorder %s34, 0
      %p209 = por %p207, %p208
      %s210 = ssub.s32 %s36, %s43
      %p211 = scmp.eq.s32.totalorder %s210, 0
      %s213 = sadd.s32 %s212, 1
      %s214 = scalar_select %p211, %s212, %s213
      %p217 = pneg %p211
      %p218 = scmp.eq.s32.totalorder %s28, 3
      %p219 = por %p217, %p218
      %p220 = scmp.ne.s32.totalorder %s212, %s215
      %p221 = scmp.eq.s32.totalorder %s28, 0
      %p222 = por %p220, %p221
      %p223 = scmp.ne.s32.totalorder %s212, %s215
      %p224 = scmp.eq.s32.totalorder %s33, 3
      %p225 = por %p223, %p224
      %p226 = scmp.ne.s32.totalorder %s215, %s216
      %p227 = scmp.eq.s32.totalorder %s33, 0
      %p228 = por %p226, %p227
      %p229 = scmp.ne.s32.totalorder %s215, %s216
      %p230 = scmp.eq.s32.totalorder %s34, 3
      %p231 = por %p229, %p230
      %p233 = scmp.ne.s32.totalorder %s216, %s232
      %p234 = scmp.eq.s32.totalorder %s34, 0
      %p235 = por %p233, %p234
      %s236 = ssub.s32 %s36, %s43
      %p237 = scmp.eq.s32.totalorder %s236, 0
      %s239 = sadd.s32 %s238, 1
      %s240 = scalar_select %p237, %s238, %s239
      %p243 = pneg %p237
      %p244 = scmp.eq.s32.totalorder %s28, 3
      %p245 = por %p243, %p244
      %p246 = scmp.ne.s32.totalorder %s238, %s241
      %p247 = scmp.eq.s32.totalorder %s28, 0
      %p248 = por %p246, %p247
      %p249 = scmp.ne.s32.totalorder %s238, %s241
      %p250 = scmp.eq.s32.totalorder %s33, 3
      %p251 = por %p249, %p250
      %p252 = scmp.ne.s32.totalorder %s241, %s242
      %p253 = scmp.eq.s32.totalorder %s33, 0
      %p254 = por %p252, %p253
      %p255 = scmp.ne.s32.totalorder %s241, %s242
      %p256 = scmp.eq.s32.totalorder %s34, 3
      %p257 = por %p255, %p256
      %p259 = scmp.ne.s32.totalorder %s242, %s258
      %p260 = scmp.eq.s32.totalorder %s34, 0
      %p261 = por %p259, %p260
      %s262 = ssub.s32 %s36, %s43
      %p263 = scmp.eq.s32.totalorder %s262, 0
      %s265 = sadd.s32 %s264, 1
      %s266 = scalar_select %p263, %s264, %s265
      %p269 = pneg %p263
      %p270 = scmp.eq.s32.totalorder %s28, 3
      %p271 = por %p269, %p270
      %p272 = scmp.ne.s32.totalorder %s264, %s267
      %p273 = scmp.eq.s32.totalorder %s28, 0
      %p274 = por %p272, %p273
      %p275 = scmp.ne.s32.totalorder %s264, %s267
      %p276 = scmp.eq.s32.totalorder %s33, 3
      %p277 = por %p275, %p276
      %p278 = scmp.ne.s32.totalorder %s267, %s268
      %p279 = scmp.eq.s32.totalorder %s33, 0
      %p280 = por %p278, %p279
      %p281 = scmp.ne.s32.totalorder %s267, %s268
      %p282 = scmp.eq.s32.totalorder %s34, 3
      %p283 = por %p281, %p282
      %p285 = scmp.ne.s32.totalorder %s268, %s284
      %p286 = scmp.eq.s32.totalorder %s34, 0
      %p287 = por %p285, %p286
      %s288 = ssub.s32 %s36, %s43
      %p289 = scmp.eq.s32.totalorder %s288, 0
      %s291 = sadd.s32 %s290, 1
      %s292 = scalar_select %p289, %s290, %s291
      %p295 = pneg %p289
      %p296 = scmp.eq.s32.totalorder %s28, 3
      %p297 = por %p295, %p296
      %p298 = scmp.ne.s32.totalorder %s290, %s293
      %p299 = scmp.eq.s32.totalorder %s28, 0
      %p300 = por %p298, %p299
      %p301 = scmp.ne.s32.totalorder %s290, %s293
      %p302 = scmp.eq.s32.totalorder %s33, 3
      %p303 = por %p301, %p302
      %p304 = scmp.ne.s32.totalorder %s293, %s294
      %p305 = scmp.eq.s32.totalorder %s33, 0
      %p306 = por %p304, %p305
      %p307 = scmp.ne.s32.totalorder %s293, %s294
      %p308 = scmp.eq.s32.totalorder %s34, 3
      %p309 = por %p307, %p308
      %p311 = scmp.ne.s32.totalorder %s294, %s310
      %p312 = scmp.eq.s32.totalorder %s34, 0
      %p313 = por %p311, %p312
      %s314 = ssub.s32 %s36, %s43
      %p315 = scmp.eq.s32.totalorder %s314, 0
      %s317 = sadd.s32 %s316, 1
      %s318 = scalar_select %p315, %s316, %s317
      %p321 = pneg %p315
      %p322 = scmp.eq.s32.totalorder %s28, 3
      %p323 = por %p321, %p322
      %p324 = scmp.ne.s32.totalorder %s316, %s319
      %p325 = scmp.eq.s32.totalorder %s28, 0
      %p326 = por %p324, %p325
      %p327 = scmp.ne.s32.totalorder %s316, %s319
      %p328 = scmp.eq.s32.totalorder %s33, 3
      %p329 = por %p327, %p328
      %p330 = scmp.ne.s32.totalorder %s319, %s320
      %p331 = scmp.eq.s32.totalorder %s33, 0
      %p332 = por %p330, %p331
      %p333 = scmp.ne.s32.totalorder %s319, %s320
      %p334 = scmp.eq.s32.totalorder %s34, 3
      %p335 = por %p333, %p334
      %p337 = scmp.ne.s32.totalorder %s320, %s336
      %p338 = scmp.eq.s32.totalorder %s34, 0
      %p339 = por %p337, %p338
      %s340 = ssub.s32 %s36, %s43
      %p341 = scmp.eq.s32.totalorder %s340, 0
      %s343 = sadd.s32 %s342, 1
      %s344 = scalar_select %p341, %s342, %s343
      %p347 = pneg %p341
      %p348 = scmp.eq.s32.totalorder %s28, 3
      %p349 = por %p347, %p348
      %p350 = scmp.ne.s32.totalorder %s342, %s345
      %p351 = scmp.eq.s32.totalorder %s28, 0
      %p352 = por %p350, %p351
      %p353 = scmp.ne.s32.totalorder %s342, %s345
      %p354 = scmp.eq.s32.totalorder %s33, 3
      %p355 = por %p353, %p354
      %p356 = scmp.ne.s32.totalorder %s345, %s346
      %p357 = scmp.eq.s32.totalorder %s33, 0
      %p358 = por %p356, %p357
      %p359 = scmp.ne.s32.totalorder %s345, %s346
      %p360 = scmp.eq.s32.totalorder %s34, 3
      %p361 = por %p359, %p360
      %p363 = scmp.ne.s32.totalorder %s346, %s362
      %p364 = scmp.eq.s32.totalorder %s34, 0
      %p365 = por %p363, %p364
      %s366 = ssub.s32 %s36, %s43
      %p367 = scmp.eq.s32.totalorder %s366, 0
      %s369 = sadd.s32 %s368, 1
      %s370 = scalar_select %p367, %s368, %s369
      %p373 = pneg %p367
      %p374 = scmp.eq.s32.totalorder %s28, 3
      %p375 = por %p373, %p374
      %p376 = scmp.ne.s32.totalorder %s368, %s371
      %p377 = scmp.eq.s32.totalorder %s28, 0
      %p378 = por %p376, %p377
      %p379 = scmp.ne.s32.totalorder %s368, %s371
      %p380 = scmp.eq.s32.totalorder %s33, 3
      %p381 = por %p379, %p380
      %p382 = scmp.ne.s32.totalorder %s371, %s372
      %p383 = scmp.eq.s32.totalorder %s33, 0
      %p384 = por %p382, %p383
      %p385 = scmp.ne.s32.totalorder %s371, %s372
      %p386 = scmp.eq.s32.totalorder %s34, 3
      %p387 = por %p385, %p386
      %p389 = scmp.ne.s32.totalorder %s372, %s388
      %p390 = scmp.eq.s32.totalorder %s34, 0
      %p391 = por %p389, %p390
      %s392 = ssub.s32 %s36, %s43
      %p393 = scmp.eq.s32.totalorder %s392, 0
      %s395 = sadd.s32 %s394, 1
      %s396 = scalar_select %p393, %s394, %s395
      %p399 = pneg %p393
      %p400 = scmp.eq.s32.totalorder %s28, 3
      %p401 = por %p399, %p400
      %p402 = scmp.ne.s32.totalorder %s394, %s397
      %p403 = scmp.eq.s32.totalorder %s28, 0
      %p404 = por %p402, %p403
      %p405 = scmp.ne.s32.totalorder %s394, %s397
      %p406 = scmp.eq.s32.totalorder %s33, 3
      %p407 = por %p405, %p406
      %p408 = scmp.ne.s32.totalorder %s397, %s398
      %p409 = scmp.eq.s32.totalorder %s33, 0
      %p410 = por %p408, %p409
      %p411 = scmp.ne.s32.totalorder %s397, %s398
      %p412 = scmp.eq.s32.totalorder %s34, 3
      %p413 = por %p411, %p412
      %p415 = scmp.ne.s32.totalorder %s398, %s414
      %p416 = scmp.eq.s32.totalorder %s34, 0
      %p417 = por %p415, %p416
      %s419 = sadd.s32 %s418, 1
      %p422 = scmp.eq.s32.totalorder %s28, 3
      %p423 = scmp.ne.s32.totalorder %s418, %s420
      %p424 = scmp.eq.s32.totalorder %s28, 0
      %p425 = por %p423, %p424
      %p426 = scmp.ne.s32.totalorder %s418, %s420
      %p427 = scmp.eq.s32.totalorder %s33, 3
      %p428 = por %p426, %p427
      %p429 = scmp.ne.s32.totalorder %s420, %s421
      %p430 = scmp.eq.s32.totalorder %s33, 0
      %p431 = por %p429, %p430
      %p432 = scmp.ne.s32.totalorder %s420, %s421
      %p433 = scmp.eq.s32.totalorder %s34, 3
      %p434 = por %p432, %p433
      %p436 = scmp.ne.s32.totalorder %s421, %s435
      %p437 = scmp.eq.s32.totalorder %s34, 0
      %p438 = por %p436, %p437
      %s440 = sadd.s32 %s439, 1
      %p443 = scmp.eq.s32.totalorder %s28, 3
      %p444 = scmp.ne.s32.totalorder %s439, %s441
      %p445 = scmp.eq.s32.totalorder %s28, 0
      %p446 = por %p444, %p445
      %p447 = scmp.ne.s32.totalorder %s439, %s441
      %p448 = scmp.eq.s32.totalorder %s33, 3
      %p449 = por %p447, %p448
      %p450 = scmp.ne.s32.totalorder %s441, %s442
      %p451 = scmp.eq.s32.totalorder %s33, 0
      %p452 = por %p450, %p451
      %p453 = scmp.ne.s32.totalorder %s441, %s442
      %p454 = scmp.eq.s32.totalorder %s34, 3
      %p455 = por %p453, %p454
      %p457 = scmp.ne.s32.totalorder %s442, %s456
      %p458 = scmp.eq.s32.totalorder %s34, 0
      %p459 = por %p457, %p458
      %s461 = sadd.s32 %s460, 1
      %p464 = scmp.eq.s32.totalorder %s28, 3
      %p465 = scmp.ne.s32.totalorder %s460, %s462
      %p466 = scmp.eq.s32.totalorder %s28, 0
      %p467 = por %p465, %p466
      %p468 = scmp.ne.s32.totalorder %s460, %s462
      %p469 = scmp.eq.s32.totalorder %s33, 3
      %p470 = por %p468, %p469
      %p471 = scmp.ne.s32.totalorder %s462, %s463
      %p472 = scmp.eq.s32.totalorder %s33, 0
      %p473 = por %p471, %p472
      %p474 = scmp.ne.s32.totalorder %s462, %s463
      %p475 = scmp.eq.s32.totalorder %s34, 3
      %p476 = por %p474, %p475
      %p478 = scmp.ne.s32.totalorder %s463, %s477
      %p479 = scmp.eq.s32.totalorder %s34, 0
      %p480 = por %p478, %p479
      %s482 = sadd.s32 %s481, 1
      %p485 = scmp.eq.s32.totalorder %s28, 3
      %p486 = scmp.ne.s32.totalorder %s481, %s483
      %p487 = scmp.eq.s32.totalorder %s28, 0
      %p488 = por %p486, %p487
      %p489 = scmp.ne.s32.totalorder %s481, %s483
      %p490 = scmp.eq.s32.totalorder %s33, 3
      %p491 = por %p489, %p490
      %p492 = scmp.ne.s32.totalorder %s483, %s484
      %p493 = scmp.eq.s32.totalorder %s33, 0
      %p494 = por %p492, %p493
      %p495 = scmp.ne.s32.totalorder %s483, %s484
      %p496 = scmp.eq.s32.totalorder %s34, 3
      %p497 = por %p495, %p496
      %p499 = scmp.ne.s32.totalorder %s484, %s498
      %p500 = scmp.eq.s32.totalorder %s34, 0
      %p501 = por %p499, %p500
      %s502 = ssub.s32 %s35, %s47
      %p503 = scmp.eq.s32.totalorder %s502, 0
      %s505 = sadd.s32 %s504, 1
      %s506 = scalar_select %p503, %s504, %s505
      %p509 = pneg %p503
      %p510 = scmp.eq.s32.totalorder %s28, 3
      %p511 = por %p509, %p510
      %p512 = scmp.ne.s32.totalorder %s504, %s507
      %p513 = scmp.eq.s32.totalorder %s28, 0
      %p514 = por %p512, %p513
      %p515 = scmp.ne.s32.totalorder %s504, %s507
      %p516 = scmp.eq.s32.totalorder %s33, 3
      %p517 = por %p515, %p516
      %p518 = scmp.ne.s32.totalorder %s507, %s508
      %p519 = scmp.eq.s32.totalorder %s33, 0
      %p520 = por %p518, %p519
      %p521 = scmp.ne.s32.totalorder %s507, %s508
      %p522 = scmp.eq.s32.totalorder %s34, 3
      %p523 = por %p521, %p522
      %p525 = scmp.ne.s32.totalorder %s508, %s524
      %p526 = scmp.eq.s32.totalorder %s34, 0
      %p527 = por %p525, %p526
      %p528 = scmp.le.s32.totalorder 1, %s28
      %p529 = scmp.lt.s32.totalorder %s28, 5
      %p530 = pnand %p528, %p529
      %p531 = pneg %p530
      // Predicated region
      $region9: #{tpu_custom_call.1} parent=5 // pred_check
        _
      $region10: #{tpu_custom_call.1} parent=5 // pred_check_branch
        %533 = sbr.rel (%p530) target = $region12
      $region11: #{tpu_custom_call.1} parent=5 // pred_region
        %s534 = ssub.s32 %s28, 1
        // Predicated region
        $region13: #{tpu_custom_call.1} parent=11 // pred_check
          %p535 = pneg %p87
        $region14: #{tpu_custom_call.1} parent=11 // pred_check_branch
          %537 = sbr.rel (%p535) target = $region16
        $region15: #{tpu_custom_call.1} parent=11 // pred_region
          _
        $region16: #{tpu_custom_call.1} parent=11 // pred_fallthru
          _
        // Predicated region
        $region17: #{tpu_custom_call.1} parent=11 // pred_check
          %p538 = pneg %p108
        $region18: #{tpu_custom_call.1} parent=11 // pred_check_branch
          %540 = sbr.rel (%p538) target = $region20
        $region19: #{tpu_custom_call.1} parent=11 // pred_region
          _
        $region20: #{tpu_custom_call.1} parent=11 // pred_fallthru
          _
        // Predicated region
        $region21: #{tpu_custom_call.1} parent=11 // pred_check
          %p541 = pneg %p129
        $region22: #{tpu_custom_call.1} parent=11 // pred_check_branch
          %543 = sbr.rel (%p541) target = $region24
        $region23: #{tpu_custom_call.1} parent=11 // pred_region
          _
        $region24: #{tpu_custom_call.1} parent=11 // pred_fallthru
          _
        // Predicated region
        $region25: #{tpu_custom_call.1} parent=11 // pred_check
          %p544 = pneg %p150
        $region26: #{tpu_custom_call.1} parent=11 // pred_check_branch
          %546 = sbr.rel (%p544) target = $region28
        $region27: #{tpu_custom_call.1} parent=11 // pred_region
          _
        $region28: #{tpu_custom_call.1} parent=11 // pred_fallthru
          _
        // Predicated region
        $region29: #{tpu_custom_call.1} parent=11 // pred_check
          %p547 = pneg %p431
        $region30: #{tpu_custom_call.1} parent=11 // pred_check_branch
          %549 = sbr.rel (%p547) target = $region32
        $region31: #{tpu_custom_call.1} parent=11 // pred_region
          _
        $region32: #{tpu_custom_call.1} parent=11 // pred_fallthru
          _
        // Predicated region
        $region33: #{tpu_custom_call.1} parent=11 // pred_check
          %p550 = pneg %p452
        $region34: #{tpu_custom_call.1} parent=11 // pred_check_branch
          %552 = sbr.rel (%p550) target = $region36
        $region35: #{tpu_custom_call.1} parent=11 // pred_region
          _
        $region36: #{tpu_custom_call.1} parent=11 // pred_fallthru
          _
        // Predicated region
        $region37: #{tpu_custom_call.1} parent=11 // pred_check
          %p553 = pneg %p473
        $region38: #{tpu_custom_call.1} parent=11 // pred_check_branch
          %555 = sbr.rel (%p553) target = $region40
        $region39: #{tpu_custom_call.1} parent=11 // pred_region
          _
        $region40: #{tpu_custom_call.1} parent=11 // pred_fallthru
          _
        // Predicated region
        $region41: #{tpu_custom_call.1} parent=11 // pred_check
          %p556 = pneg %p494
        $region42: #{tpu_custom_call.1} parent=11 // pred_check_branch
          %558 = sbr.rel (%p556) target = $region44
        $region43: #{tpu_custom_call.1} parent=11 // pred_region
          _
        $region44: #{tpu_custom_call.1} parent=11 // pred_fallthru
          _
      $region12: #{tpu_custom_call.1} parent=5 // pred_fallthru
        _
      %p559 = scmp.lt.s32.totalorder %s28, 4
      // Predicated region
      $region45: #{tpu_custom_call.1} parent=5 // pred_check
        %p560 = pneg %p559
      $region46: #{tpu_custom_call.1} parent=5 // pred_check_branch
        %562 = sbr.rel (%p560) target = $region48
      $region47: #{tpu_custom_call.1} parent=5 // pred_region
        // Predicated region
        $region49: #{tpu_custom_call.1} parent=47 // pred_check
          %p563 = pneg %p60
        $region50: #{tpu_custom_call.1} parent=47 // pred_check_branch
          %565 = sbr.rel (%p563) target = $region52
        $region51: #{tpu_custom_call.1} parent=47 // pred_region
          %p566 = scmp.lt.s32.totalorder %s35, 1
          %s567 = scalar_select %p566, %s35, 1
          %s568 = smul.addr %s567, 2
          %s569 = smul.addr %s568, 4
          %s570 = scalar_lea.vmem %s0, %s569
        $region52: #{tpu_custom_call.1} parent=47 // pred_fallthru
          _
        // Predicated region
        $region53: #{tpu_custom_call.1} parent=47 // pred_check
          %p571 = pneg %p170
        $region54: #{tpu_custom_call.1} parent=47 // pred_check_branch
          %573 = sbr.rel (%p571) target = $region56
        $region55: #{tpu_custom_call.1} parent=47 // pred_region
          %p574 = scmp.lt.s32.totalorder %s36, 1
          %s575 = scalar_select %p574, %s36, 1
          %s576 = scalar_lea.vmem %s5, %s575
        $region56: #{tpu_custom_call.1} parent=47 // pred_fallthru
          _
        // Predicated region
        $region57: #{tpu_custom_call.1} parent=47 // pred_check
          %p577 = pneg %p196
        $region58: #{tpu_custom_call.1} parent=47 // pred_check_branch
          %579 = sbr.rel (%p577) target = $region60
        $region59: #{tpu_custom_call.1} parent=47 // pred_region
          %p580 = scmp.lt.s32.totalorder %s36, 1
          %s581 = scalar_select %p580, %s36, 1
          %s582 = scalar_lea.vmem %s6, %s581
        $region60: #{tpu_custom_call.1} parent=47 // pred_fallthru
          _
        // Predicated region
        $region61: #{tpu_custom_call.1} parent=47 // pred_check
          %p583 = pneg %p222
        $region62: #{tpu_custom_call.1} parent=47 // pred_check_branch
          %585 = sbr.rel (%p583) target = $region64
        $region63: #{tpu_custom_call.1} parent=47 // pred_region
          %p586 = scmp.lt.s32.totalorder %s36, 1
          %s587 = scalar_select %p586, %s36, 1
          %s588 = smul.addr %s587, 4
          %s589 = smul.addr %s588, 4
          %s590 = scalar_lea.vmem %s7, %s589
        $region64: #{tpu_custom_call.1} parent=47 // pred_fallthru
          _
        // Predicated region
        $region65: #{tpu_custom_call.1} parent=47 // pred_check
          %p591 = pneg %p248
        $region66: #{tpu_custom_call.1} parent=47 // pred_check_branch
          %593 = sbr.rel (%p591) target = $region68
        $region67: #{tpu_custom_call.1} parent=47 // pred_region
          %p594 = scmp.lt.s32.totalorder %s36, 1
          %s595 = scalar_select %p594, %s36, 1
          %s596 = scalar_lea.vmem %s8, %s595
        $region68: #{tpu_custom_call.1} parent=47 // pred_fallthru
          _
        // Predicated region
        $region69: #{tpu_custom_call.1} parent=47 // pred_check
          %p597 = pneg %p274
        $region70: #{tpu_custom_call.1} parent=47 // pred_check_branch
          %599 = sbr.rel (%p597) target = $region72
        $region71: #{tpu_custom_call.1} parent=47 // pred_region
          %p600 = scmp.lt.s32.totalorder %s36, 1
          %s601 = scalar_select %p600, %s36, 1
          %s602 = smul.addr %s601, 4
          %s603 = smul.addr %s602, 4
          %s604 = scalar_lea.vmem %s9, %s603
        $region72: #{tpu_custom_call.1} parent=47 // pred_fallthru
          _
        // Predicated region
        $region73: #{tpu_custom_call.1} parent=47 // pred_check
          %p605 = pneg %p300
        $region74: #{tpu_custom_call.1} parent=47 // pred_check_branch
          %607 = sbr.rel (%p605) target = $region76
        $region75: #{tpu_custom_call.1} parent=47 // pred_region
          %p608 = scmp.lt.s32.totalorder %s36, 1
          %s609 = scalar_select %p608, %s36, 1
          %s610 = scalar_lea.vmem %s10, %s609
        $region76: #{tpu_custom_call.1} parent=47 // pred_fallthru
          _
        // Predicated region
        $region77: #{tpu_custom_call.1} parent=47 // pred_check
          %p611 = pneg %p326
        $region78: #{tpu_custom_call.1} parent=47 // pred_check_branch
          %613 = sbr.rel (%p611) target = $region80
        $region79: #{tpu_custom_call.1} parent=47 // pred_region
          %p614 = scmp.lt.s32.totalorder %s36, 1
          %s615 = scalar_select %p614, %s36, 1
          %s616 = smul.addr %s615, 4
          %s617 = smul.addr %s616, 4
          %s618 = scalar_lea.vmem %s11, %s617
        $region80: #{tpu_custom_call.1} parent=47 // pred_fallthru
          _
        // Predicated region
        $region81: #{tpu_custom_call.1} parent=47 // pred_check
          %p619 = pneg %p352
        $region82: #{tpu_custom_call.1} parent=47 // pred_check_branch
          %621 = sbr.rel (%p619) target = $region84
        $region83: #{tpu_custom_call.1} parent=47 // pred_region
          %p622 = scmp.lt.s32.totalorder %s36, 1
          %s623 = scalar_select %p622, %s36, 1
          %s624 = scalar_lea.vmem %s12, %s623
        $region84: #{tpu_custom_call.1} parent=47 // pred_fallthru
          _
        // Predicated region
        $region85: #{tpu_custom_call.1} parent=47 // pred_check
          %p625 = pneg %p378
        $region86: #{tpu_custom_call.1} parent=47 // pred_check_branch
          %627 = sbr.rel (%p625) target = $region88
        $region87: #{tpu_custom_call.1} parent=47 // pred_region
          %p628 = scmp.lt.s32.totalorder %s36, 1
          %s629 = scalar_select %p628, %s36, 1
          %s630 = smul.addr %s629, 16
          %s631 = smul.addr %s630, 4
          %s632 = scalar_lea.vmem %s13, %s631
        $region88: #{tpu_custom_call.1} parent=47 // pred_fallthru
          _
        // Predicated region
        $region89: #{tpu_custom_call.1} parent=47 // pred_check
          %p633 = pneg %p404
        $region90: #{tpu_custom_call.1} parent=47 // pred_check_branch
          %635 = sbr.rel (%p633) target = $region92
        $region91: #{tpu_custom_call.1} parent=47 // pred_region
          %p636 = scmp.lt.s32.totalorder %s36, 1
          %s637 = scalar_select %p636, %s36, 1
          %s638 = scalar_lea.vmem %s14, %s637
        $region92: #{tpu_custom_call.1} parent=47 // pred_fallthru
          _
      $region48: #{tpu_custom_call.1} parent=5 // pred_fallthru
        _
      %p639 = scmp.le.s32.totalorder 1, %s28
      %p640 = scmp.lt.s32.totalorder %s28, 5
      %p641 = pnand %p639, %p640
      %p642 = pneg %p641
      // Predicated region
      $region93: #{tpu_custom_call.1} parent=5 // pred_check
        _
      $region94: #{tpu_custom_call.1} parent=5 // pred_check_branch
        %644 = sbr.rel (%p641) target = $region96
      $region95: #{tpu_custom_call.1} parent=5 // pred_region
        %s645 = ssub.s32 %s28, 1
        %p646 = scmp.lt.s32.totalorder %s37, 1
        %s647 = scalar_select %p646, %s37, 1
        %s648 = smul.addr %s647, 2
        %s649 = smul.addr %s648, 4
        %s650 = scalar_lea.vmem %s0, %s649
        %p651 = pneg %p66
        %p652 = pneg %p63
        %p653 = pneg %p87
        %p654 = pneg %p84
        %p655 = pneg %p108
        %p656 = pneg %p105
        %p657 = pneg %p129
        %p658 = pneg %p126
        %p659 = pneg %p150
        %p660 = pneg %p147
        %p661 = scmp.lt.s32.totalorder %s38, 1
        %s662 = scalar_select %p661, %s38, 1
        %s663 = scalar_lea.vmem %s5, %s662
        %p664 = pneg %p176
        %p665 = pneg %p173
        %p666 = scmp.lt.s32.totalorder %s38, 1
        %s667 = scalar_select %p666, %s38, 1
        %s668 = scalar_lea.vmem %s6, %s667
        %p669 = pneg %p202
        %p670 = pneg %p199
        %p671 = scmp.lt.s32.totalorder %s38, 1
        %s672 = scalar_select %p671, %s38, 1
        %s673 = smul.addr %s672, 4
        %s674 = smul.addr %s673, 4
        %s675 = scalar_lea.vmem %s7, %s674
        %p676 = pneg %p228
        %p677 = pneg %p225
        %p678 = scmp.lt.s32.totalorder %s38, 1
        %s679 = scalar_select %p678, %s38, 1
        %s680 = scalar_lea.vmem %s8, %s679
        %p681 = pneg %p254
        %p682 = pneg %p251
        %p683 = scmp.lt.s32.totalorder %s38, 1
        %s684 = scalar_select %p683, %s38, 1
        %s685 = smul.addr %s684, 4
        %s686 = smul.addr %s685, 4
        %s687 = scalar_lea.vmem %s9, %s686
        %p688 = pneg %p280
        %p689 = pneg %p277
        %p690 = scmp.lt.s32.totalorder %s38, 1
        %s691 = scalar_select %p690, %s38, 1
        %s692 = scalar_lea.vmem %s10, %s691
        %p693 = pneg %p306
        %p694 = pneg %p303
        %p695 = scmp.lt.s32.totalorder %s38, 1
        %s696 = scalar_select %p695, %s38, 1
        %s697 = smul.addr %s696, 4
        %s698 = smul.addr %s697, 4
        %s699 = scalar_lea.vmem %s11, %s698
        %p700 = pneg %p332
        %p701 = pneg %p329
        %p702 = scmp.lt.s32.totalorder %s38, 1
        %s703 = scalar_select %p702, %s38, 1
        %s704 = scalar_lea.vmem %s12, %s703
        %p705 = pneg %p358
        %p706 = pneg %p355
        %p707 = scmp.lt.s32.totalorder %s38, 1
        %s708 = scalar_select %p707, %s38, 1
        %s709 = smul.addr %s708, 16
        %s710 = smul.addr %s709, 4
        %s711 = scalar_lea.vmem %s13, %s710
        %p712 = pneg %p384
        %p713 = pneg %p381
        %p714 = scmp.lt.s32.totalorder %s38, 1
        %s715 = scalar_select %p714, %s38, 1
        %s716 = scalar_lea.vmem %s14, %s715
        %p717 = pneg %p410
        %p718 = pneg %p407
        %p719 = pneg %p431
        %p720 = pneg %p428
        %p721 = pneg %p452
        %p722 = pneg %p449
        %p723 = pneg %p473
        %p724 = pneg %p470
        %p725 = pneg %p494
        %p726 = pneg %p491
        %p727 = pneg %p520
        %p728 = pneg %p517
        %s729 = sand.u32 %s507, 1
        %s730 = scalar_lea.sflag [#allocation4], %s729
        %s731 = sand.u32 %s507, 1
        %s732 = smul.addr %s731, 24
        %s733 = scalar_lea.vmem [#allocation3], %s732
        %p734 = scmp.lt.s32.totalorder %s37, 1
        %s735 = scalar_select %p734, %s37, 1
        %s736 = smul.addr %s735, 2
        %s737 = smul.addr %s736, 4
        %s738 = scalar_lea.vmem %s0, %s737
        %p739 = scmp.lt.s32.totalorder %s38, 1
        %s740 = scalar_select %p739, %s38, 1
        %s741 = scalar_lea.vmem %s5, %s740
        %p742 = scmp.lt.s32.totalorder %s38, 1
        %s743 = scalar_select %p742, %s38, 1
        %s744 = scalar_lea.vmem %s6, %s743
        %p745 = scmp.lt.s32.totalorder %s38, 1
        %s746 = scalar_select %p745, %s38, 1
        %s747 = smul.addr %s746, 4
        %s748 = smul.addr %s747, 4
        %s749 = scalar_lea.vmem %s7, %s748
        %p750 = scmp.lt.s32.totalorder %s38, 1
        %s751 = scalar_select %p750, %s38, 1
        %s752 = scalar_lea.vmem %s8, %s751
        %p753 = scmp.lt.s32.totalorder %s38, 1
        %s754 = scalar_select %p753, %s38, 1
        %s755 = smul.addr %s754, 4
        %s756 = smul.addr %s755, 4
        %s757 = scalar_lea.vmem %s9, %s756
        %p758 = scmp.lt.s32.totalorder %s38, 1
        %s759 = scalar_select %p758, %s38, 1
        %s760 = scalar_lea.vmem %s10, %s759
        %p761 = scmp.lt.s32.totalorder %s38, 1
        %s762 = scalar_select %p761, %s38, 1
        %s763 = smul.addr %s762, 4
        %s764 = smul.addr %s763, 4
        %s765 = scalar_lea.vmem %s11, %s764
        %p766 = scmp.lt.s32.totalorder %s38, 1
        %s767 = scalar_select %p766, %s38, 1
        %s768 = scalar_lea.vmem %s12, %s767
        %p769 = scmp.lt.s32.totalorder %s38, 1
        %s770 = scalar_select %p769, %s38, 1
        %s771 = smul.addr %s770, 16
        %s772 = smul.addr %s771, 4
        %s773 = scalar_lea.vmem %s13, %s772
        %p774 = scmp.lt.s32.totalorder %s38, 1
        %s775 = scalar_select %p774, %s38, 1
        %s776 = scalar_lea.vmem %s14, %s775
        %p778 = scmp.eq.s32.totalorder %s38, 0
        // Predicated region
        $region97: #{tpu_custom_call.1} parent=95 // pred_check
          %p779 = pneg %p778
        $region98: #{tpu_custom_call.1} parent=95 // pred_check_branch
          %781 = sbr.rel (%p779) target = $region100
        $region99: #{tpu_custom_call.1} parent=95 // pred_region
          %v782 = vld [vmem:[%s738] sm:$0xf]
          %v783 = vld [vmem:[%s738 + $0x4] sm:$0xf]
          %v784 = vld [vmem:[%s1] sm:$0xf]
          %v785 = vld [vmem:[%s1 + $0x4] sm:$0xf]
          %v786 = vld [vmem:[%s1 + $0x8] sm:$0xf]
          %v787 = vld [vmem:[%s1 + $0xc] sm:$0xf]
          %v788 = vld [vmem:[%s1 + $0x10] sm:$0xf]
          %v789 = vld [vmem:[%s1 + $0x14] sm:$0xf]
          %v790 = vld [vmem:[%s2] sm:$0x1]
          %v792 = vperm.slane %v790, 0
          %v796 = vunpack.c.l.b16 %v782
          %v797 = vunpack.c.l.b16 %v783
          %v798 = vpack.c.b16 %v797, %v796
          %v805 = vunpack.c.l.b16 %v784
          %v806 = vunpack.c.l.b16 %v785
          %v807 = vunpack.c.l.b16 %v786
          %v808 = vunpack.c.l.b16 %v787
          %v809 = vunpack.c.l.b16 %v788
          %v810 = vunpack.c.l.b16 %v789
          %v811 = vpack.c.b16 %v806, %v805
          %v812 = vpack.c.b16 %v808, %v807
          %v813 = vpack.c.b16 %v810, %v809
          %vm817 = vcmask 392192
          %v819 = vsel %vm817, %v798, 0
          %821 = vmatpush.bf16.msra.mxu0 0
          %822 = vmatpush.bf16.msra.mxu0 0
          %823 = vmatpush.bf16.msra.mxu0 0
          %824 = vmatpush.bf16.msra.mxu0 0
          %825 = vmatpush.bf16.msra.mxu0 0
          %826 = vmatpush.bf16.msra.mxu0 %v813
          %827 = vmatpush.bf16.msra.mxu0 %v812
          %828 = vmatpush.bf16.msra.mxu0 %v811
          %829 = vmatmul.bf16.gmra.mxu0 %v819
          %v830 = vpop.f32.mrf.mxu0
          %v831 = vadd.f32 %v792, %v830
          %v832 = vpop.f32.mrf.mxu0
          %v833 = vadd.f32 %v792, %v832
          %834 = vdwg.mxu0
          %vm835 = vcmask 261120
          %836 = vst.msk [vmem:[#allocation2] sm:$0xff] %vm835, %v831
          %837 = vst.msk [vmem:[#allocation2 + $0x8] sm:$0xff] %vm835, %v833
          %v838 = vld [vmem:[%s3] sm:$0x1]
          %vm839 = vcmask 253952
          %840 = vst.msk [vmem:[#allocation2 + $0x10] sm:$0x1] %vm839, %v838
          %vm841 = vcmask 260096
          %842 = vst.msk [vmem:[#allocation2 + $0x11] sm:$0x7f] %vm841, 0.0
          %v843 = vld [vmem:[#allocation2] sm:$0xff]
          %v844 = vld [vmem:[#allocation2 + $0x8] sm:$0xff]
          %v845 = vld [vmem:[#allocation2 + $0x10] sm:$0xff]
          %v846 = vld [vmem:[%s4] sm:$0xff]
          %v847 = vld [vmem:[%s4 + $0x8] sm:$0xff]
          %v848 = vld [vmem:[%s4 + $0x10] sm:$0xff]
          %v849 = vadd.f32 %v843, %v846
          %v850 = vadd.f32 %v844, %v847
          %v851 = vadd.f32 %v845, %v848
          %852 = vst.msk [vmem:[#allocation2] sm:$0xff] %vm835, %v849
          %853 = vst.msk [vmem:[#allocation2 + $0x8] sm:$0xff] %vm835, %v850
          %854 = vst.msk [vmem:[#allocation2 + $0x10] sm:$0xff] %vm835, %v851
        $region100: #{tpu_custom_call.1} parent=95 // pred_fallthru
          _
        %v855 = vlaneseq
        %v856 = vand.u32 %v855, 127
        %vm857 = vcmp.lt.s32.totalorder %v856, 17
        %v858 = vsel %vm857, 0.0, -1e+30
        %v859 = vld [vmem:[%s741] sm:$0x1]
        %v860 = vld [vmem:[%s744] sm:$0x1]
        %v861 = vld [vmem:[#allocation2] sm:$0xff]
        %v862 = vld [vmem:[#allocation2 + $0x8] sm:$0xff]
        %v863 = vld [vmem:[#allocation2 + $0x10] sm:$0xff]
        %vm864 = vcmask 261120
        %v865 = vsel %vm864, %v861, 0.0
        %866 = vadd.xlane.f32.xlu0 %v865
        %v867 = vpop.xlane.xlu0 %866
        %v868 = vsel %vm864, %v862, 0.0
        %869 = vadd.xlane.f32.xlu0 %v868
        %v870 = vpop.xlane.xlu0 %869
        %v871 = vsel %vm864, %v863, 0.0
        %872 = vadd.xlane.f32.xlu0 %v871
        %v873 = vpop.xlane.xlu0 %872
        %v874 = vrcp.pop 32.0
        %v875 = vmul.f32 32.0, %v874
        %v876 = vsub.f32 1.0, %v875
        %v877 = vmul.f32 %v874, %v876
        %v878 = vadd.f32 %v874, %v877
        %vm879 = vweird.f32 %v874
        %v880 = vsel %vm879, %v874, %v878
        %v881 = vmul.f32 %v867, %v880
        %v882 = vmul.f32 %v870, %v880
        %v883 = vmul.f32 %v873, %v880
        %v884 = vsub.f32 %v861, %v881
        %v885 = vsub.f32 %v862, %v882
        %v886 = vsub.f32 %v863, %v883
        %v887 = vmul.f32 %v884, %v884
        %v888 = vmul.f32 %v885, %v885
        %v889 = vmul.f32 %v886, %v886
        %v890 = vsel %vm864, %v887, 0.0
        %891 = vadd.xlane.f32.xlu0 %v890
        %v892 = vpop.xlane.xlu0 %891
        %v893 = vsel %vm864, %v888, 0.0
        %894 = vadd.xlane.f32.xlu0 %v893
        %v895 = vpop.xlane.xlu0 %894
        %v896 = vsel %vm864, %v889, 0.0
        %897 = vadd.xlane.f32.xlu0 %v896
        %v898 = vpop.xlane.xlu0 %897
        %v899 = vmul.f32 %v892, %v880
        %v900 = vmul.f32 %v895, %v880
        %v901 = vmul.f32 %v898, %v880
        %v902 = vadd.f32 %v899, 1e-05
        %v903 = vadd.f32 %v900, 1e-05
        %v904 = vadd.f32 %v901, 1e-05
        %v905 = vrsqrt.pop %v902
        %v906 = vmul.f32 %v905, %v902
        %v907 = vmul.f32 %v906, %v905
        %v908 = vmul.f32 0.5, %v907
        %v909 = vsub.f32 1.5, %v908
        %v910 = vmul.f32 %v905, %v909
        %vm911 = vweird.f32 %v902
        %vm912 = vweird.f32 %v905
        %vm913 = vmor %vm911, %vm912
        %v914 = vsel %vm913, %v905, %v910
        %v915 = vrsqrt.pop %v903
        %v916 = vmul.f32 %v915, %v903
        %v917 = vmul.f32 %v916, %v915
        %v918 = vmul.f32 0.5, %v917
        %v919 = vsub.f32 1.5, %v918
        %v920 = vmul.f32 %v915, %v919
        %vm921 = vweird.f32 %v903
        %vm922 = vweird.f32 %v915
        %vm923 = vmor %vm921, %vm922
        %v924 = vsel %vm923, %v915, %v920
        %v925 = vrsqrt.pop %v904
        %v926 = vmul.f32 %v925, %v904
        %v927 = vmul.f32 %v926, %v925
        %v928 = vmul.f32 0.5, %v927
        %v929 = vsub.f32 1.5, %v928
        %v930 = vmul.f32 %v925, %v929
        %vm931 = vweird.f32 %v904
        %vm932 = vweird.f32 %v925
        %vm933 = vmor %vm931, %vm932
        %v934 = vsel %vm933, %v925, %v930
        %v935 = vmul.f32 %v884, %v914
        %v936 = vmul.f32 %v885, %v924
        %v937 = vmul.f32 %v886, %v934
        %v939 = vperm.slane %v859, 0
        %v941 = vmul.f32 %v935, %v939
        %v942 = vmul.f32 %v936, %v939
        %v943 = vmul.f32 %v937, %v939
        %v945 = vperm.slane %v860, 0
        %v947 = vadd.f32 %v941, %v945
        %v948 = vadd.f32 %v942, %v945
        %v949 = vadd.f32 %v943, %v945
        %v950 = vpack.c.bf16 %v948, %v947
        %v951 = vpack.c.bf16 %v949, %v949
        %v952 = vld [vmem:[%s749] sm:$0xf]
        %v953 = vld [vmem:[%s749 + $0x4] sm:$0xf]
        %v954 = vld [vmem:[%s749 + $0x8] sm:$0xf]
        %v955 = vld [vmem:[%s749 + $0xc] sm:$0xf]
        %v956 = vld [vmem:[%s752] sm:$0x1]
        %v958 = vperm.slane %v956, 0
        %v964 = vunpack.c.l.b16 %v952
        %v965 = vunpack.c.l.b16 %v953
        %v966 = vunpack.c.l.b16 %v954
        %v967 = vunpack.c.l.b16 %v955
        %v968 = vpack.c.b16 %v965, %v964
        %v969 = vpack.c.b16 %v967, %v966
        %v973 = vsel %vm864, %v950, 0
        %v976 = vsel %vm864, %v951, 0
        %978 = vmatpush.bf16.msra.mxu0 0
        %979 = vmatpush.bf16.msra.mxu0 0
        %980 = vmatpush.bf16.msra.mxu0 0
        %981 = vmatpush.bf16.msra.mxu0 0
        %982 = vmatpush.bf16.msra.mxu0 0
        %983 = vmatpush.bf16.msra.mxu0 0
        %984 = vmatpush.bf16.msra.mxu0 %v969
        %985 = vmatpush.bf16.msra.mxu0 %v968
        %986 = vmatmul.bf16.gmra.mxu0 %v973
        %v987 = vpop.f32.mrf.mxu0
        %v988 = vadd.f32 %v958, %v987
        %v989 = vpop.f32.mrf.mxu0
        %v990 = vadd.f32 %v958, %v989
        %991 = vmatmul.bf16.gmra.mxu0 %v976
        %v992 = vpop.f32.mrf.mxu0
        %v993 = vadd.f32 %v958, %v992
        %v994 = vpop.f32.mrf.mxu0
        %995 = vdwg.mxu0
        %v996 = vpack.c.bf16 %v990, %v988
        %v997 = vpack.c.bf16 %v993, %v993
        %1000 = vrot.lane.b32.xlu0 %v996, 96
        %v1001 = vpop.permute.xlu0 %1000
        %1002 = vrot.lane.b32.xlu0 %v997, 96
        %v1003 = vpop.permute.xlu0 %1002
        %vm1004 = vcmask 64512
        %v1006 = vsel %vm1004, %v996, 0
        %v1009 = vsel %vm1004, %v997, 0
        %v1012 = vsel %vm1004, %v1001, 0
        %v1015 = vsel %vm1004, %v1003, 0
        %1017 = vmatpush.bf16.xpose.msra.mxu0 0
        %1018 = vmatpush.bf16.xpose.msra.mxu0 0
        %1019 = vmatpush.bf16.xpose.msra.mxu0 0
        %1020 = vmatpush.bf16.xpose.msra.mxu0 0
        %1021 = vmatpush.bf16.xpose.msra.mxu0 0
        %1022 = vmatpush.bf16.xpose.msra.mxu0 0
        %1023 = vmatpush.bf16.xpose.msra.mxu0 %v1015
        %1024 = vmatpush.bf16.xpose.msra.mxu0 %v1012
        %1025 = vmatmul.bf16.gmra.mxu0 %v1006
        %v1026 = vpop.f32.mrf.mxu0
        %v1027 = vadd.f32 %v858, %v1026
        %v1028 = vpop.f32.mrf.mxu0
        %v1029 = vadd.f32 %v858, %v1028
        %1030 = vmatmul.bf16.gmra.mxu0 %v1009
        %v1031 = vpop.f32.mrf.mxu0
        %v1032 = vadd.f32 %v858, %v1031
        %v1033 = vpop.f32.mrf.mxu0
        %1034 = vdwg.mxu0
        %vm1035 = vcmask 195584
        %v1036 = vsel %vm1035, %v1027, -inf
        %1037 = vmax.xlane.f32.xlu0 %v1036
        %v1038 = vpop.xlane.xlu0 %1037
        %v1039 = vsel %vm1035, %v1029, -inf
        %1040 = vmax.xlane.f32.xlu0 %v1039
        %v1041 = vpop.xlane.xlu0 %1040
        %v1042 = vsel %vm1035, %v1032, -inf
        %1043 = vmax.xlane.f32.xlu0 %v1042
        %v1044 = vpop.xlane.xlu0 %1043
        %v1045 = vsub.f32 %v1027, %v1038
        %v1046 = vsub.f32 %v1029, %v1041
        %v1047 = vsub.f32 %v1032, %v1044
        %v1048 = vmul.f32 %v1045, 1.442695
        %v1049 = vpow.pop %v1048
        %v1050 = vmul.f32 %v1046, 1.442695
        %v1051 = vpow.pop %v1050
        %v1052 = vmul.f32 %v1047, 1.442695
        %v1053 = vpow.pop %v1052
        %v1054 = vsel %vm1035, %v1049, 0.0
        %1055 = vadd.xlane.f32.xlu0 %v1054
        %v1056 = vpop.xlane.xlu0 %1055
        %v1057 = vsel %vm1035, %v1051, 0.0
        %1058 = vadd.xlane.f32.xlu0 %v1057
        %v1059 = vpop.xlane.xlu0 %1058
        %v1060 = vsel %vm1035, %v1053, 0.0
        %1061 = vadd.xlane.f32.xlu0 %v1060
        %v1062 = vpop.xlane.xlu0 %1061
        %v1063 = vrcp.pop %v1056
        %v1064 = vrcp.pop %v1059
        %v1065 = vrcp.pop %v1062
        %v1066 = vmul.f32 %v1049, %v1063
        %v1067 = vmul.f32 %v1051, %v1064
        %v1068 = vmul.f32 %v1053, %v1065
        %v1069 = vpack.c.bf16 %v1067, %v1066
        %v1070 = vpack.c.bf16 %v1068, %v1068
        %1071 = vrot.lane.b32.xlu0 %v996, 64
        %v1072 = vpop.permute.xlu0 %1071
        %1073 = vrot.lane.b32.xlu0 %v997, 64
        %v1074 = vpop.permute.xlu0 %1073
        %v1077 = vsel %vm1035, %v1069, 0
        %v1080 = vsel %vm1035, %v1070, 0
        %vm1082 = vcmask 1043456
        %v1084 = vsel %vm1082, %v1074, 0
        %1086 = vmatpush.bf16.msra.mxu0 0
        %1087 = vmatpush.bf16.msra.mxu0 0
        %1088 = vmatpush.bf16.msra.mxu0 0
        %1089 = vmatpush.bf16.msra.mxu0 0
        %1090 = vmatpush.bf16.msra.mxu0 0
        %1091 = vmatpush.bf16.msra.mxu0 0
        %1092 = vmatpush.bf16.msra.mxu0 %v1084
        %1093 = vmatpush.bf16.msra.mxu0 %v1072
        %1094 = vmatmul.bf16.gmra.mxu0 %v1077
        %v1095 = vpop.f32.mrf.mxu0
        %v1096 = vadd.f32 0.0, %v1095
        %v1097 = vpop.f32.mrf.mxu0
        %v1098 = vadd.f32 0.0, %v1097
        %1099 = vmatmul.bf16.gmra.mxu0 %v1080
        %v1100 = vpop.f32.mrf.mxu0
        %v1101 = vadd.f32 0.0, %v1100
        %v1102 = vpop.f32.mrf.mxu0
        %1103 = vdwg.mxu0
        %1104 = vrot.lane.b32.xlu0 %v996, 120
        %v1105 = vpop.permute.xlu0 %1104
        %1106 = vrot.lane.b32.xlu0 %v997, 120
        %v1107 = vpop.permute.xlu0 %1106
        %1108 = vrot.lane.b32.xlu0 %v996, 88
        %v1109 = vpop.permute.xlu0 %1108
        %1110 = vrot.lane.b32.xlu0 %v997, 88
        %v1111 = vpop.permute.xlu0 %1110
        %v1113 = vsel %vm1004, %v1105, 0
        %v1116 = vsel %vm1004, %v1107, 0
        %v1119 = vsel %vm1004, %v1109, 0
        %v1122 = vsel %vm1004, %v1111, 0
        %1124 = vmatpush.bf16.xpose.msra.mxu0 0
        %1125 = vmatpush.bf16.xpose.msra.mxu0 0
        %1126 = vmatpush.bf16.xpose.msra.mxu0 0
        %1127 = vmatpush.bf16.xpose.msra.mxu0 0
        %1128 = vmatpush.bf16.xpose.msra.mxu0 0
        %1129 = vmatpush.bf16.xpose.msra.mxu0 0
        %1130 = vmatpush.bf16.xpose.msra.mxu0 %v1122
        %1131 = vmatpush.bf16.xpose.msra.mxu0 %v1119
        %1132 = vmatmul.bf16.gmra.mxu0 %v1113
        %v1133 = vpop.f32.mrf.mxu0
        %v1134 = vadd.f32 %v858, %v1133
        %v1135 = vpop.f32.mrf.mxu0
        %v1136 = vadd.f32 %v858, %v1135
        %1137 = vmatmul.bf16.gmra.mxu0 %v1116
        %v1138 = vpop.f32.mrf.mxu0
        %v1139 = vadd.f32 %v858, %v1138
        %v1140 = vpop.f32.mrf.mxu0
        %1141 = vdwg.mxu0
        %v1142 = vsel %vm1035, %v1134, -inf
        %1143 = vmax.xlane.f32.xlu0 %v1142
        %v1144 = vpop.xlane.xlu0 %1143
        %v1145 = vsel %vm1035, %v1136, -inf
        %1146 = vmax.xlane.f32.xlu0 %v1145
        %v1147 = vpop.xlane.xlu0 %1146
        %v1148 = vsel %vm1035, %v1139, -inf
        %1149 = vmax.xlane.f32.xlu0 %v1148
        %v1150 = vpop.xlane.xlu0 %1149
        %v1151 = vsub.f32 %v1134, %v1144
        %v1152 = vsub.f32 %v1136, %v1147
        %v1153 = vsub.f32 %v1139, %v1150
        %v1154 = vmul.f32 %v1151, 1.442695
        %v1155 = vpow.pop %v1154
        %v1156 = vmul.f32 %v1152, 1.442695
        %v1157 = vpow.pop %v1156
        %v1158 = vmul.f32 %v1153, 1.442695
        %v1159 = vpow.pop %v1158
        %v1160 = vsel %vm1035, %v1155, 0.0
        %1161 = vadd.xlane.f32.xlu0 %v1160
        %v1162 = vpop.xlane.xlu0 %1161
        %v1163 = vsel %vm1035, %v1157, 0.0
        %1164 = vadd.xlane.f32.xlu0 %v1163
        %v1165 = vpop.xlane.xlu0 %1164
        %v1166 = vsel %vm1035, %v1159, 0.0
        %1167 = vadd.xlane.f32.xlu0 %v1166
        %v1168 = vpop.xlane.xlu0 %1167
        %v1169 = vrcp.pop %v1162
        %v1170 = vrcp.pop %v1165
        %v1171 = vrcp.pop %v1168
        %v1172 = vmul.f32 %v1155, %v1169
        %v1173 = vmul.f32 %v1157, %v1170
        %v1174 = vmul.f32 %v1159, %v1171
        %v1175 = vpack.c.bf16 %v1173, %v1172
        %v1176 = vpack.c.bf16 %v1174, %v1174
        %1177 = vrot.lane.b32.xlu0 %v996, 56
        %v1178 = vpop.permute.xlu0 %1177
        %1179 = vrot.lane.b32.xlu0 %v997, 56
        %v1180 = vpop.permute.xlu0 %1179
        %v1183 = vsel %vm1035, %v1175, 0
        %v1186 = vsel %vm1035, %v1176, 0
        %v1189 = vsel %vm1082, %v1180, 0
        %1191 = vmatpush.bf16.msra.mxu0 0
        %1192 = vmatpush.bf16.msra.mxu0 0
        %1193 = vmatpush.bf16.msra.mxu0 0
        %1194 = vmatpush.bf16.msra.mxu0 0
        %1195 = vmatpush.bf16.msra.mxu0 0
        %1196 = vmatpush.bf16.msra.mxu0 0
        %1197 = vmatpush.bf16.msra.mxu0 %v1189
        %1198 = vmatpush.bf16.msra.mxu0 %v1178
        %1199 = vmatmul.bf16.gmra.mxu0 %v1183
        %v1200 = vpop.f32.mrf.mxu0
        %v1201 = vadd.f32 0.0, %v1200
        %v1202 = vpop.f32.mrf.mxu0
        %v1203 = vadd.f32 0.0, %v1202
        %1204 = vmatmul.bf16.gmra.mxu0 %v1186
        %v1205 = vpop.f32.mrf.mxu0
        %v1206 = vadd.f32 0.0, %v1205
        %v1207 = vpop.f32.mrf.mxu0
        %1208 = vdwg.mxu0
        %1209 = vrot.lane.b32.xlu0 %v996, 112
        %v1210 = vpop.permute.xlu0 %1209
        %1211 = vrot.lane.b32.xlu0 %v997, 112
        %v1212 = vpop.permute.xlu0 %1211
        %1213 = vrot.lane.b32.xlu0 %v996, 80
        %v1214 = vpop.permute.xlu0 %1213
        %1215 = vrot.lane.b32.xlu0 %v997, 80
        %v1216 = vpop.permute.xlu0 %1215
        %v1218 = vsel %vm1004, %v1210, 0
        %v1221 = vsel %vm1004, %v1212, 0
        %v1224 = vsel %vm1004, %v1214, 0
        %v1227 = vsel %vm1004, %v1216, 0
        %1229 = vmatpush.bf16.xpose.msra.mxu0 0
        %1230 = vmatpush.bf16.xpose.msra.mxu0 0
        %1231 = vmatpush.bf16.xpose.msra.mxu0 0
        %1232 = vmatpush.bf16.xpose.msra.mxu0 0
        %1233 = vmatpush.bf16.xpose.msra.mxu0 0
        %1234 = vmatpush.bf16.xpose.msra.mxu0 0
        %1235 = vmatpush.bf16.xpose.msra.mxu0 %v1227
        %1236 = vmatpush.bf16.xpose.msra.mxu0 %v1224
        %1237 = vmatmul.bf16.gmra.mxu0 %v1218
        %v1238 = vpop.f32.mrf.mxu0
        %v1239 = vadd.f32 %v858, %v1238
        %v1240 = vpop.f32.mrf.mxu0
        %v1241 = vadd.f32 %v858, %v1240
        %1242 = vmatmul.bf16.gmra.mxu0 %v1221
        %v1243 = vpop.f32.mrf.mxu0
        %v1244 = vadd.f32 %v858, %v1243
        %v1245 = vpop.f32.mrf.mxu0
        %1246 = vdwg.mxu0
        %v1247 = vsel %vm1035, %v1239, -inf
        %1248 = vmax.xlane.f32.xlu0 %v1247
        %v1249 = vpop.xlane.xlu0 %1248
        %v1250 = vsel %vm1035, %v1241, -inf
        %1251 = vmax.xlane.f32.xlu0 %v1250
        %v1252 = vpop.xlane.xlu0 %1251
        %v1253 = vsel %vm1035, %v1244, -inf
        %1254 = vmax.xlane.f32.xlu0 %v1253
        %v1255 = vpop.xlane.xlu0 %1254
        %v1256 = vsub.f32 %v1239, %v1249
        %v1257 = vsub.f32 %v1241, %v1252
        %v1258 = vsub.f32 %v1244, %v1255
        %v1259 = vmul.f32 %v1256, 1.442695
        %v1260 = vpow.pop %v1259
        %v1261 = vmul.f32 %v1257, 1.442695
        %v1262 = vpow.pop %v1261
        %v1263 = vmul.f32 %v1258, 1.442695
        %v1264 = vpow.pop %v1263
        %v1265 = vsel %vm1035, %v1260, 0.0
        %1266 = vadd.xlane.f32.xlu0 %v1265
        %v1267 = vpop.xlane.xlu0 %1266
        %v1268 = vsel %vm1035, %v1262, 0.0
        %1269 = vadd.xlane.f32.xlu0 %v1268
        %v1270 = vpop.xlane.xlu0 %1269
        %v1271 = vsel %vm1035, %v1264, 0.0
        %1272 = vadd.xlane.f32.xlu0 %v1271
        %v1273 = vpop.xlane.xlu0 %1272
        %v1274 = vrcp.pop %v1267
        %v1275 = vrcp.pop %v1270
        %v1276 = vrcp.pop %v1273
        %v1277 = vmul.f32 %v1260, %v1274
        %v1278 = vmul.f32 %v1262, %v1275
        %v1279 = vmul.f32 %v1264, %v1276
        %v1280 = vpack.c.bf16 %v1278, %v1277
        %v1281 = vpack.c.bf16 %v1279, %v1279
        %1282 = vrot.lane.b32.xlu0 %v996, 48
        %v1283 = vpop.permute.xlu0 %1282
        %1284 = vrot.lane.b32.xlu0 %v997, 48
        %v1285 = vpop.permute.xlu0 %1284
        %v1288 = vsel %vm1035, %v1280, 0
        %v1291 = vsel %vm1035, %v1281, 0
        %v1294 = vsel %vm1082, %v1285, 0
        %1296 = vmatpush.bf16.msra.mxu0 0
        %1297 = vmatpush.bf16.msra.mxu0 0
        %1298 = vmatpush.bf16.msra.mxu0 0
        %1299 = vmatpush.bf16.msra.mxu0 0
        %1300 = vmatpush.bf16.msra.mxu0 0
        %1301 = vmatpush.bf16.msra.mxu0 0
        %1302 = vmatpush.bf16.msra.mxu0 %v1294
        %1303 = vmatpush.bf16.msra.mxu0 %v1283
        %1304 = vmatmul.bf16.gmra.mxu0 %v1288
        %v1305 = vpop.f32.mrf.mxu0
        %v1306 = vadd.f32 0.0, %v1305
        %v1307 = vpop.f32.mrf.mxu0
        %v1308 = vadd.f32 0.0, %v1307
        %1309 = vmatmul.bf16.gmra.mxu0 %v1291
        %v1310 = vpop.f32.mrf.mxu0
        %v1311 = vadd.f32 0.0, %v1310
        %v1312 = vpop.f32.mrf.mxu0
        %1313 = vdwg.mxu0
        %1314 = vrot.lane.b32.xlu0 %v996, 104
        %v1315 = vpop.permute.xlu0 %1314
        %1316 = vrot.lane.b32.xlu0 %v997, 104
        %v1317 = vpop.permute.xlu0 %1316
        %1318 = vrot.lane.b32.xlu0 %v996, 72
        %v1319 = vpop.permute.xlu0 %1318
        %1320 = vrot.lane.b32.xlu0 %v997, 72
        %v1321 = vpop.permute.xlu0 %1320
        %v1323 = vsel %vm1004, %v1315, 0
        %v1326 = vsel %vm1004, %v1317, 0
        %v1329 = vsel %vm1004, %v1319, 0
        %v1332 = vsel %vm1004, %v1321, 0
        %1334 = vmatpush.bf16.xpose.msra.mxu0 0
        %1335 = vmatpush.bf16.xpose.msra.mxu0 0
        %1336 = vmatpush.bf16.xpose.msra.mxu0 0
        %1337 = vmatpush.bf16.xpose.msra.mxu0 0
        %1338 = vmatpush.bf16.xpose.msra.mxu0 0
        %1339 = vmatpush.bf16.xpose.msra.mxu0 0
        %1340 = vmatpush.bf16.xpose.msra.mxu0 %v1332
        %1341 = vmatpush.bf16.xpose.msra.mxu0 %v1329
        %1342 = vmatmul.bf16.gmra.mxu0 %v1323
        %v1343 = vpop.f32.mrf.mxu0
        %v1344 = vadd.f32 %v858, %v1343
        %v1345 = vpop.f32.mrf.mxu0
        %v1346 = vadd.f32 %v858, %v1345
        %1347 = vmatmul.bf16.gmra.mxu0 %v1326
        %v1348 = vpop.f32.mrf.mxu0
        %v1349 = vadd.f32 %v858, %v1348
        %v1350 = vpop.f32.mrf.mxu0
        %1351 = vdwg.mxu0
        %v1352 = vsel %vm1035, %v1344, -inf
        %1353 = vmax.xlane.f32.xlu0 %v1352
        %v1354 = vpop.xlane.xlu0 %1353
        %v1355 = vsel %vm1035, %v1346, -inf
        %1356 = vmax.xlane.f32.xlu0 %v1355
        %v1357 = vpop.xlane.xlu0 %1356
        %v1358 = vsel %vm1035, %v1349, -inf
        %1359 = vmax.xlane.f32.xlu0 %v1358
        %v1360 = vpop.xlane.xlu0 %1359
        %v1361 = vsub.f32 %v1344, %v1354
        %v1362 = vsub.f32 %v1346, %v1357
        %v1363 = vsub.f32 %v1349, %v1360
        %v1364 = vmul.f32 %v1361, 1.442695
        %v1365 = vpow.pop %v1364
        %v1366 = vmul.f32 %v1362, 1.442695
        %v1367 = vpow.pop %v1366
        %v1368 = vmul.f32 %v1363, 1.442695
        %v1369 = vpow.pop %v1368
        %v1370 = vsel %vm1035, %v1365, 0.0
        %1371 = vadd.xlane.f32.xlu0 %v1370
        %v1372 = vpop.xlane.xlu0 %1371
        %v1373 = vsel %vm1035, %v1367, 0.0
        %1374 = vadd.xlane.f32.xlu0 %v1373
        %v1375 = vpop.xlane.xlu0 %1374
        %v1376 = vsel %vm1035, %v1369, 0.0
        %1377 = vadd.xlane.f32.xlu0 %v1376
        %v1378 = vpop.xlane.xlu0 %1377
        %v1379 = vrcp.pop %v1372
        %v1380 = vrcp.pop %v1375
        %v1381 = vrcp.pop %v1378
        %v1382 = vmul.f32 %v1365, %v1379
        %v1383 = vmul.f32 %v1367, %v1380
        %v1384 = vmul.f32 %v1369, %v1381
        %v1385 = vpack.c.bf16 %v1383, %v1382
        %v1386 = vpack.c.bf16 %v1384, %v1384
        %1387 = vrot.lane.b32.xlu0 %v996, 40
        %v1388 = vpop.permute.xlu0 %1387
        %1389 = vrot.lane.b32.xlu0 %v997, 40
        %v1390 = vpop.permute.xlu0 %1389
        %v1393 = vsel %vm1035, %v1385, 0
        %v1396 = vsel %vm1035, %v1386, 0
        %v1399 = vsel %vm1082, %v1390, 0
        %1401 = vmatpush.bf16.msra.mxu0 0
        %1402 = vmatpush.bf16.msra.mxu0 0
        %1403 = vmatpush.bf16.msra.mxu0 0
        %1404 = vmatpush.bf16.msra.mxu0 0
        %1405 = vmatpush.bf16.msra.mxu0 0
        %1406 = vmatpush.bf16.msra.mxu0 0
        %1407 = vmatpush.bf16.msra.mxu0 %v1399
        %1408 = vmatpush.bf16.msra.mxu0 %v1388
        %1409 = vmatmul.bf16.gmra.mxu0 %v1393
        %v1410 = vpop.f32.mrf.mxu0
        %v1411 = vadd.f32 0.0, %v1410
        %v1412 = vpop.f32.mrf.mxu0
        %v1413 = vadd.f32 0.0, %v1412
        %1414 = vmatmul.bf16.gmra.mxu0 %v1396
        %v1415 = vpop.f32.mrf.mxu0
        %v1416 = vadd.f32 0.0, %v1415
        %v1417 = vpop.f32.mrf.mxu0
        %1418 = vdwg.mxu0
        %1422 = vrot.lane.b32.xlu0 %v1201, 8
        %v1423 = vpop.permute.xlu0 %1422
        %1424 = vrot.lane.b32.xlu0 %v1203, 8
        %v1425 = vpop.permute.xlu0 %1424
        %1426 = vrot.lane.b32.xlu0 %v1206, 8
        %v1427 = vpop.permute.xlu0 %1426
        %1434 = vrot.lane.b32.xlu0 %v1306, 16
        %v1435 = vpop.permute.xlu0 %1434
        %1436 = vrot.lane.b32.xlu0 %v1308, 16
        %v1437 = vpop.permute.xlu0 %1436
        %1438 = vrot.lane.b32.xlu0 %v1311, 16
        %v1439 = vpop.permute.xlu0 %1438
        %1446 = vrot.lane.b32.xlu0 %v1411, 24
        %v1447 = vpop.permute.xlu0 %1446
        %1448 = vrot.lane.b32.xlu0 %v1413, 24
        %v1449 = vpop.permute.xlu0 %1448
        %1450 = vrot.lane.b32.xlu0 %v1416, 24
        %v1451 = vpop.permute.xlu0 %1450
        %v1455 = vsel %vm1004, %v1096, %v1423
        %v1456 = vsel %vm1004, %v1098, %v1425
        %v1457 = vsel %vm1004, %v1101, %v1427
        %vm1458 = vcmask 130048
        %v1459 = vsel %vm1458, %v1455, %v1435
        %v1460 = vsel %vm1458, %v1456, %v1437
        %v1461 = vsel %vm1458, %v1457, %v1439
        %v1462 = vsel %vm1035, %v1459, %v1447
        %v1463 = vsel %vm1035, %v1460, %v1449
        %v1464 = vsel %vm1035, %v1461, %v1451
        %v1465 = vpack.c.bf16 %v1463, %v1462
        %v1466 = vpack.c.bf16 %v1464, %v1464
        %v1467 = vld [vmem:[%s757] sm:$0xf]
        %v1468 = vld [vmem:[%s757 + $0x4] sm:$0xf]
        %v1469 = vld [vmem:[%s757 + $0x8] sm:$0xf]
        %v1470 = vld [vmem:[%s757 + $0xc] sm:$0xf]
        %v1475 = vunpack.c.l.b16 %v1467
        %v1476 = vunpack.c.l.b16 %v1468
        %v1477 = vunpack.c.l.b16 %v1469
        %v1478 = vunpack.c.l.b16 %v1470
        %v1479 = vpack.c.b16 %v1476, %v1475
        %v1480 = vpack.c.b16 %v1478, %v1477
        %v1484 = vsel %vm864, %v1465, 0
        %v1487 = vsel %vm864, %v1466, 0
        %1489 = vmatpush.bf16.msra.mxu0 0
        %1490 = vmatpush.bf16.msra.mxu0 0
        %1491 = vmatpush.bf16.msra.mxu0 0
        %1492 = vmatpush.bf16.msra.mxu0 0
        %1493 = vmatpush.bf16.msra.mxu0 0
        %1494 = vmatpush.bf16.msra.mxu0 0
        %1495 = vmatpush.bf16.msra.mxu0 %v1480
        %1496 = vmatpush.bf16.msra.mxu0 %v1479
        %1497 = vmatmul.bf16.gmra.mxu0 %v1484
        %v1498 = vpop.f32.mrf.mxu0
        %v1499 = vadd.f32 0.0, %v1498
        %v1500 = vpop.f32.mrf.mxu0
        %v1501 = vadd.f32 0.0, %v1500
        %1502 = vmatmul.bf16.gmra.mxu0 %v1487
        %v1503 = vpop.f32.mrf.mxu0
        %v1504 = vadd.f32 0.0, %v1503
        %v1505 = vpop.f32.mrf.mxu0
        %1506 = vdwg.mxu0
        %v1507 = vadd.f32 %v861, %v1499
        %v1508 = vadd.f32 %v862, %v1501
        %v1509 = vadd.f32 %v863, %v1504
        %v1510 = vld [vmem:[%s760] sm:$0x1]
        %v1512 = vperm.slane %v1510, 0
        %v1514 = vadd.f32 %v1507, %v1512
        %v1515 = vadd.f32 %v1508, %v1512
        %v1516 = vadd.f32 %v1509, %v1512
        %v1517 = vsel %vm864, %v1514, 0.0
        %1518 = vadd.xlane.f32.xlu0 %v1517
        %v1519 = vpop.xlane.xlu0 %1518
        %v1520 = vsel %vm864, %v1515, 0.0
        %1521 = vadd.xlane.f32.xlu0 %v1520
        %v1522 = vpop.xlane.xlu0 %1521
        %v1523 = vsel %vm864, %v1516, 0.0
        %1524 = vadd.xlane.f32.xlu0 %v1523
        %v1525 = vpop.xlane.xlu0 %1524
        %v1526 = vmul.f32 %v1519, %v880
        %v1527 = vmul.f32 %v1522, %v880
        %v1528 = vmul.f32 %v1525, %v880
        %v1529 = vsub.f32 %v1514, %v1526
        %v1530 = vsub.f32 %v1515, %v1527
        %v1531 = vsub.f32 %v1516, %v1528
        %v1532 = vmul.f32 %v1529, %v1529
        %v1533 = vmul.f32 %v1530, %v1530
        %v1534 = vmul.f32 %v1531, %v1531
        %v1535 = vsel %vm864, %v1532, 0.0
        %1536 = vadd.xlane.f32.xlu0 %v1535
        %v1537 = vpop.xlane.xlu0 %1536
        %v1538 = vsel %vm864, %v1533, 0.0
        %1539 = vadd.xlane.f32.xlu0 %v1538
        %v1540 = vpop.xlane.xlu0 %1539
        %v1541 = vsel %vm864, %v1534, 0.0
        %1542 = vadd.xlane.f32.xlu0 %v1541
        %v1543 = vpop.xlane.xlu0 %1542
        %v1544 = vmul.f32 %v1537, %v880
        %v1545 = vmul.f32 %v1540, %v880
        %v1546 = vmul.f32 %v1543, %v880
        %v1547 = vadd.f32 %v1544, 1e-05
        %v1548 = vadd.f32 %v1545, 1e-05
        %v1549 = vadd.f32 %v1546, 1e-05
        %v1550 = vrsqrt.pop %v1547
        %v1551 = vmul.f32 %v1550, %v1547
        %v1552 = vmul.f32 %v1551, %v1550
        %v1553 = vmul.f32 0.5, %v1552
        %v1554 = vsub.f32 1.5, %v1553
        %v1555 = vmul.f32 %v1550, %v1554
        %vm1556 = vweird.f32 %v1547
        %vm1557 = vweird.f32 %v1550
        %vm1558 = vmor %vm1556, %vm1557
        %v1559 = vsel %vm1558, %v1550, %v1555
        %v1560 = vrsqrt.pop %v1548
        %v1561 = vmul.f32 %v1560, %v1548
        %v1562 = vmul.f32 %v1561, %v1560
        %v1563 = vmul.f32 0.5, %v1562
        %v1564 = vsub.f32 1.5, %v1563
        %v1565 = vmul.f32 %v1560, %v1564
        %vm1566 = vweird.f32 %v1548
        %vm1567 = vweird.f32 %v1560
        %vm1568 = vmor %vm1566, %vm1567
        %v1569 = vsel %vm1568, %v1560, %v1565
        %v1570 = vrsqrt.pop %v1549
        %v1571 = vmul.f32 %v1570, %v1549
        %v1572 = vmul.f32 %v1571, %v1570
        %v1573 = vmul.f32 0.5, %v1572
        %v1574 = vsub.f32 1.5, %v1573
        %v1575 = vmul.f32 %v1570, %v1574
        %vm1576 = vweird.f32 %v1549
        %vm1577 = vweird.f32 %v1570
        %vm1578 = vmor %vm1576, %vm1577
        %v1579 = vsel %vm1578, %v1570, %v1575
        %v1580 = vmul.f32 %v1529, %v1559
        %v1581 = vmul.f32 %v1530, %v1569
        %v1582 = vmul.f32 %v1531, %v1579
        %v1583 = vmul.f32 %v1580, %v939
        %v1584 = vmul.f32 %v1581, %v939
        %v1585 = vmul.f32 %v1582, %v939
        %v1586 = vadd.f32 %v1583, %v945
        %v1587 = vadd.f32 %v1584, %v945
        %v1588 = vadd.f32 %v1585, %v945
        %v1589 = vpack.c.bf16 %v1587, %v1586
        %v1590 = vpack.c.bf16 %v1588, %v1588
        %v1591 = vld [vmem:[%s765] sm:$0xf]
        %v1592 = vld [vmem:[%s765 + $0x4] sm:$0xf]
        %v1593 = vld [vmem:[%s765 + $0x8] sm:$0xf]
        %v1594 = vld [vmem:[%s765 + $0xc] sm:$0xf]
        %v1595 = vld [vmem:[%s768] sm:$0x1]
        %v1597 = vperm.slane %v1595, 0
        %v1603 = vunpack.c.l.b16 %v1591
        %v1604 = vunpack.c.l.b16 %v1592
        %v1605 = vunpack.c.l.b16 %v1593
        %v1606 = vunpack.c.l.b16 %v1594
        %v1607 = vpack.c.b16 %v1604, %v1603
        %v1608 = vpack.c.b16 %v1606, %v1605
        %v1612 = vsel %vm864, %v1589, 0
        %v1615 = vsel %vm864, %v1590, 0
        %1617 = vmatpush.bf16.msra.mxu0 0
        %1618 = vmatpush.bf16.msra.mxu0 0
        %1619 = vmatpush.bf16.msra.mxu0 0
        %1620 = vmatpush.bf16.msra.mxu0 0
        %1621 = vmatpush.bf16.msra.mxu0 0
        %1622 = vmatpush.bf16.msra.mxu0 0
        %1623 = vmatpush.bf16.msra.mxu0 %v1608
        %1624 = vmatpush.bf16.msra.mxu0 %v1607
        %1625 = vmatmul.bf16.gmra.mxu0 %v1612
        %v1626 = vpop.f32.mrf.mxu0
        %v1627 = vadd.f32 %v1597, %v1626
        %v1628 = vpop.f32.mrf.mxu0
        %v1629 = vadd.f32 %v1597, %v1628
        %1630 = vmatmul.bf16.gmra.mxu0 %v1615
        %v1631 = vpop.f32.mrf.mxu0
        %v1632 = vadd.f32 %v1597, %v1631
        %v1633 = vpop.f32.mrf.mxu0
        %1634 = vdwg.mxu0
        %v1635 = vmul.f32 %v1627, 0.5
        %v1636 = vmul.f32 %v1629, 0.5
        %v1637 = vmul.f32 %v1632, 0.5
        %v1638 = vmul.f32 %v1627, 0.70710677
        %v1639 = vmul.f32 %v1629, 0.70710677
        %v1640 = vmul.f32 %v1632, 0.70710677
        %v1641 = vmul.f32 %v1638, %v1638
        %v1642 = vmin.f32 16.0, %v1641
        %v1643 = vmul.f32 %v1642, 2.1237322e-06
        %v1644 = vadd.f32 %v1643, 0.00028619796
        %v1645 = vmul.f32 %v1642, %v1644
        %v1646 = vadd.f32 %v1645, 0.0036580483
        %v1647 = vmul.f32 %v1642, %v1646
        %v1648 = vadd.f32 %v1647, 0.05243302
        %v1649 = vmul.f32 %v1642, %v1648
        %v1650 = vadd.f32 %v1649, 0.18741608
        %v1651 = vmul.f32 %v1642, %v1650
        %v1652 = vadd.f32 %v1651, 1.1283791
        %v1653 = vmul.f32 %v1638, %v1652
        %v1654 = vmul.f32 %v1642, 3.8918573e-05
        %v1655 = vadd.f32 %v1654, 0.001143296
        %v1656 = vmul.f32 %v1642, %v1655
        %v1657 = vadd.f32 %v1656, 0.014752088
        %v1658 = vmul.f32 %v1642, %v1657
        %v1659 = vadd.f32 %v1658, 0.112945676
        %v1660 = vmul.f32 %v1642, %v1659
        %v1661 = vadd.f32 %v1660, 0.4994258
        %v1662 = vmul.f32 %v1642, %v1661
        %v1663 = vadd.f32 %v1662, 1.0
        %v1664 = vrcp.pop %v1663
        %v1665 = vmul.f32 %v1663, %v1664
        %v1666 = vsub.f32 1.0, %v1665
        %v1667 = vmul.f32 %v1664, %v1666
        %v1668 = vadd.f32 %v1664, %v1667
        %vm1669 = vweird.f32 %v1663
        %vm1670 = vweird.f32 %v1664
        %vm1671 = vmor %vm1669, %vm1670
        %v1672 = vsel %vm1671, %v1664, %v1668
        %v1673 = vand.u32 2147483647, %v1663
        %vm1674 = vcmp.eq.f32.partialorder %v1673, 8.507059e+37
        %v1675 = vand.u32 %v1663, 2147483648
        %v1676 = vor.u32 1.1754944e-38, %v1675
        %v1677 = vsel %vm1674, %v1676, %v1672
        %v1678 = vmul.f32 %v1653, %v1677
        %v1679 = vmin.f32 %v1678, 1.0
        %v1680 = vmax.f32 %v1679, -1.0
        %v1681 = vmul.f32 %v1639, %v1639
        %v1682 = vmin.f32 16.0, %v1681
        %v1683 = vmul.f32 %v1682, 2.1237322e-06
        %v1684 = vadd.f32 %v1683, 0.00028619796
        %v1685 = vmul.f32 %v1682, %v1684
        %v1686 = vadd.f32 %v1685, 0.0036580483
        %v1687 = vmul.f32 %v1682, %v1686
        %v1688 = vadd.f32 %v1687, 0.05243302
        %v1689 = vmul.f32 %v1682, %v1688
        %v1690 = vadd.f32 %v1689, 0.18741608
        %v1691 = vmul.f32 %v1682, %v1690
        %v1692 = vadd.f32 %v1691, 1.1283791
        %v1693 = vmul.f32 %v1639, %v1692
        %v1694 = vmul.f32 %v1682, 3.8918573e-05
        %v1695 = vadd.f32 %v1694, 0.001143296
        %v1696 = vmul.f32 %v1682, %v1695
        %v1697 = vadd.f32 %v1696, 0.014752088
        %v1698 = vmul.f32 %v1682, %v1697
        %v1699 = vadd.f32 %v1698, 0.112945676
        %v1700 = vmul.f32 %v1682, %v1699
        %v1701 = vadd.f32 %v1700, 0.4994258
        %v1702 = vmul.f32 %v1682, %v1701
        %v1703 = vadd.f32 %v1702, 1.0
        %v1704 = vrcp.pop %v1703
        %v1705 = vmul.f32 %v1703, %v1704
        %v1706 = vsub.f32 1.0, %v1705
        %v1707 = vmul.f32 %v1704, %v1706
        %v1708 = vadd.f32 %v1704, %v1707
        %vm1709 = vweird.f32 %v1703
        %vm1710 = vweird.f32 %v1704
        %vm1711 = vmor %vm1709, %vm1710
        %v1712 = vsel %vm1711, %v1704, %v1708
        %v1713 = vand.u32 2147483647, %v1703
        %vm1714 = vcmp.eq.f32.partialorder %v1713, 8.507059e+37
        %v1715 = vand.u32 %v1703, 2147483648
        %v1716 = vor.u32 1.1754944e-38, %v1715
        %v1717 = vsel %vm1714, %v1716, %v1712
        %v1718 = vmul.f32 %v1693, %v1717
        %v1719 = vmin.f32 %v1718, 1.0
        %v1720 = vmax.f32 %v1719, -1.0
        %v1721 = vmul.f32 %v1640, %v1640
        %v1722 = vmin.f32 16.0, %v1721
        %v1723 = vmul.f32 %v1722, 2.1237322e-06
        %v1724 = vadd.f32 %v1723, 0.00028619796
        %v1725 = vmul.f32 %v1722, %v1724
        %v1726 = vadd.f32 %v1725, 0.0036580483
        %v1727 = vmul.f32 %v1722, %v1726
        %v1728 = vadd.f32 %v1727, 0.05243302
        %v1729 = vmul.f32 %v1722, %v1728
        %v1730 = vadd.f32 %v1729, 0.18741608
        %v1731 = vmul.f32 %v1722, %v1730
        %v1732 = vadd.f32 %v1731, 1.1283791
        %v1733 = vmul.f32 %v1640, %v1732
        %v1734 = vmul.f32 %v1722, 3.8918573e-05
        %v1735 = vadd.f32 %v1734, 0.001143296
        %v1736 = vmul.f32 %v1722, %v1735
        %v1737 = vadd.f32 %v1736, 0.014752088
        %v1738 = vmul.f32 %v1722, %v1737
        %v1739 = vadd.f32 %v1738, 0.112945676
        %v1740 = vmul.f32 %v1722, %v1739
        %v1741 = vadd.f32 %v1740, 0.4994258
        %v1742 = vmul.f32 %v1722, %v1741
        %v1743 = vadd.f32 %v1742, 1.0
        %v1744 = vrcp.pop %v1743
        %v1745 = vmul.f32 %v1743, %v1744
        %v1746 = vsub.f32 1.0, %v1745
        %v1747 = vmul.f32 %v1744, %v1746
        %v1748 = vadd.f32 %v1744, %v1747
        %vm1749 = vweird.f32 %v1743
        %vm1750 = vweird.f32 %v1744
        %vm1751 = vmor %vm1749, %vm1750
        %v1752 = vsel %vm1751, %v1744, %v1748
        %v1753 = vand.u32 2147483647, %v1743
        %vm1754 = vcmp.eq.f32.partialorder %v1753, 8.507059e+37
        %v1755 = vand.u32 %v1743, 2147483648
        %v1756 = vor.u32 1.1754944e-38, %v1755
        %v1757 = vsel %vm1754, %v1756, %v1752
        %v1758 = vmul.f32 %v1733, %v1757
        %v1759 = vmin.f32 %v1758, 1.0
        %v1760 = vmax.f32 %v1759, -1.0
        %v1761 = vadd.f32 %v1680, 1.0
        %v1762 = vadd.f32 %v1720, 1.0
        %v1763 = vadd.f32 %v1760, 1.0
        %v1764 = vmul.f32 %v1635, %v1761
        %v1765 = vmul.f32 %v1636, %v1762
        %v1766 = vmul.f32 %v1637, %v1763
        %v1767 = vpack.c.bf16 %v1765, %v1764
        %v1768 = vpack.c.bf16 %v1766, %v1766
        %v1769 = vld [vmem:[%s773] sm:$0xf]
        %v1770 = vld [vmem:[%s773 + $0x4] sm:$0xf]
        %v1771 = vld [vmem:[%s773 + $0x8] sm:$0xf]
        %v1772 = vld [vmem:[%s773 + $0xc] sm:$0xf]
        %v1773 = vld [vmem:[%s773 + $0x10] sm:$0xf]
        %v1774 = vld [vmem:[%s773 + $0x14] sm:$0xf]
        %v1775 = vld [vmem:[%s773 + $0x18] sm:$0xf]
        %v1776 = vld [vmem:[%s773 + $0x1c] sm:$0xf]
        %v1777 = vld [vmem:[%s773 + $0x20] sm:$0xf]
        %v1778 = vld [vmem:[%s773 + $0x24] sm:$0xf]
        %v1779 = vld [vmem:[%s773 + $0x28] sm:$0xf]
        %v1780 = vld [vmem:[%s773 + $0x2c] sm:$0xf]
        %v1781 = vld [vmem:[%s773 + $0x30] sm:$0xf]
        %v1782 = vld [vmem:[%s773 + $0x34] sm:$0xf]
        %v1783 = vld [vmem:[%s773 + $0x38] sm:$0xf]
        %v1784 = vld [vmem:[%s773 + $0x3c] sm:$0xf]
        %v1785 = vld [vmem:[%s776] sm:$0x1]
        %v1787 = vperm.slane %v1785, 0
        %v1805 = vunpack.c.l.b16 %v1769
        %v1806 = vunpack.c.l.b16 %v1770
        %v1807 = vunpack.c.l.b16 %v1771
        %v1808 = vunpack.c.l.b16 %v1772
        %v1809 = vunpack.c.l.b16 %v1773
        %v1810 = vunpack.c.l.b16 %v1774
        %v1811 = vunpack.c.l.b16 %v1775
        %v1812 = vunpack.c.l.b16 %v1776
        %v1813 = vunpack.c.l.b16 %v1777
        %v1814 = vunpack.c.l.b16 %v1778
        %v1815 = vunpack.c.l.b16 %v1779
        %v1816 = vunpack.c.l.b16 %v1780
        %v1817 = vunpack.c.l.b16 %v1781
        %v1818 = vunpack.c.l.b16 %v1782
        %v1819 = vunpack.c.l.b16 %v1783
        %v1820 = vunpack.c.l.b16 %v1784
        %v1821 = vpack.c.b16 %v1806, %v1805
        %v1822 = vpack.c.b16 %v1808, %v1807
        %v1823 = vpack.c.b16 %v1810, %v1809
        %v1824 = vpack.c.b16 %v1812, %v1811
        %v1825 = vpack.c.b16 %v1814, %v1813
        %v1826 = vpack.c.b16 %v1816, %v1815
        %v1827 = vpack.c.b16 %v1818, %v1817
        %v1828 = vpack.c.b16 %v1820, %v1819
        %1837 = vmatpush.bf16.msra.mxu0 %v1828
        %1838 = vmatpush.bf16.msra.mxu0 %v1827
        %1839 = vmatpush.bf16.msra.mxu0 %v1826
        %1840 = vmatpush.bf16.msra.mxu0 %v1825
        %1841 = vmatpush.bf16.msra.mxu0 %v1824
        %1842 = vmatpush.bf16.msra.mxu0 %v1823
        %1843 = vmatpush.bf16.msra.mxu0 %v1822
        %1844 = vmatpush.bf16.msra.mxu0 %v1821
        %1845 = vmatmul.bf16.gmra.mxu0 %v1767
        %v1846 = vpop.f32.mrf.mxu0
        %v1847 = vadd.f32 %v1787, %v1846
        %v1848 = vpop.f32.mrf.mxu0
        %v1849 = vadd.f32 %v1787, %v1848
        %1850 = vmatmul.bf16.gmra.mxu0 %v1768
        %v1851 = vpop.f32.mrf.mxu0
        %v1852 = vadd.f32 %v1787, %v1851
        %v1853 = vpop.f32.mrf.mxu0
        %1854 = vdwg.mxu0
        %v1855 = vmul.f32 %v1847, 0.5
        %v1856 = vmul.f32 %v1849, 0.5
        %v1857 = vmul.f32 %v1852, 0.5
        %v1858 = vmul.f32 %v1847, 0.70710677
        %v1859 = vmul.f32 %v1849, 0.70710677
        %v1860 = vmul.f32 %v1852, 0.70710677
        %v1861 = vmul.f32 %v1858, %v1858
        %v1862 = vmin.f32 16.0, %v1861
        %v1863 = vmul.f32 %v1862, 2.1237322e-06
        %v1864 = vadd.f32 %v1863, 0.00028619796
        %v1865 = vmul.f32 %v1862, %v1864
        %v1866 = vadd.f32 %v1865, 0.0036580483
        %v1867 = vmul.f32 %v1862, %v1866
        %v1868 = vadd.f32 %v1867, 0.05243302
        %v1869 = vmul.f32 %v1862, %v1868
        %v1870 = vadd.f32 %v1869, 0.18741608
        %v1871 = vmul.f32 %v1862, %v1870
        %v1872 = vadd.f32 %v1871, 1.1283791
        %v1873 = vmul.f32 %v1858, %v1872
        %v1874 = vmul.f32 %v1862, 3.8918573e-05
        %v1875 = vadd.f32 %v1874, 0.001143296
        %v1876 = vmul.f32 %v1862, %v1875
        %v1877 = vadd.f32 %v1876, 0.014752088
        %v1878 = vmul.f32 %v1862, %v1877
        %v1879 = vadd.f32 %v1878, 0.112945676
        %v1880 = vmul.f32 %v1862, %v1879
        %v1881 = vadd.f32 %v1880, 0.4994258
        %v1882 = vmul.f32 %v1862, %v1881
        %v1883 = vadd.f32 %v1882, 1.0
        %v1884 = vrcp.pop %v1883
        %v1885 = vmul.f32 %v1883, %v1884
        %v1886 = vsub.f32 1.0, %v1885
        %v1887 = vmul.f32 %v1884, %v1886
        %v1888 = vadd.f32 %v1884, %v1887
        %vm1889 = vweird.f32 %v1883
        %vm1890 = vweird.f32 %v1884
        %vm1891 = vmor %vm1889, %vm1890
        %v1892 = vsel %vm1891, %v1884, %v1888
        %v1893 = vand.u32 2147483647, %v1883
        %vm1894 = vcmp.eq.f32.partialorder %v1893, 8.507059e+37
        %v1895 = vand.u32 %v1883, 2147483648
        %v1896 = vor.u32 1.1754944e-38, %v1895
        %v1897 = vsel %vm1894, %v1896, %v1892
        %v1898 = vmul.f32 %v1873, %v1897
        %v1899 = vmin.f32 %v1898, 1.0
        %v1900 = vmax.f32 %v1899, -1.0
        %v1901 = vmul.f32 %v1859, %v1859
        %v1902 = vmin.f32 16.0, %v1901
        %v1903 = vmul.f32 %v1902, 2.1237322e-06
        %v1904 = vadd.f32 %v1903, 0.00028619796
        %v1905 = vmul.f32 %v1902, %v1904
        %v1906 = vadd.f32 %v1905, 0.0036580483
        %v1907 = vmul.f32 %v1902, %v1906
        %v1908 = vadd.f32 %v1907, 0.05243302
        %v1909 = vmul.f32 %v1902, %v1908
        %v1910 = vadd.f32 %v1909, 0.18741608
        %v1911 = vmul.f32 %v1902, %v1910
        %v1912 = vadd.f32 %v1911, 1.1283791
        %v1913 = vmul.f32 %v1859, %v1912
        %v1914 = vmul.f32 %v1902, 3.8918573e-05
        %v1915 = vadd.f32 %v1914, 0.001143296
        %v1916 = vmul.f32 %v1902, %v1915
        %v1917 = vadd.f32 %v1916, 0.014752088
        %v1918 = vmul.f32 %v1902, %v1917
        %v1919 = vadd.f32 %v1918, 0.112945676
        %v1920 = vmul.f32 %v1902, %v1919
        %v1921 = vadd.f32 %v1920, 0.4994258
        %v1922 = vmul.f32 %v1902, %v1921
        %v1923 = vadd.f32 %v1922, 1.0
        %v1924 = vrcp.pop %v1923
        %v1925 = vmul.f32 %v1923, %v1924
        %v1926 = vsub.f32 1.0, %v1925
        %v1927 = vmul.f32 %v1924, %v1926
        %v1928 = vadd.f32 %v1924, %v1927
        %vm1929 = vweird.f32 %v1923
        %vm1930 = vweird.f32 %v1924
        %vm1931 = vmor %vm1929, %vm1930
        %v1932 = vsel %vm1931, %v1924, %v1928
        %v1933 = vand.u32 2147483647, %v1923
        %vm1934 = vcmp.eq.f32.partialorder %v1933, 8.507059e+37
        %v1935 = vand.u32 %v1923, 2147483648
        %v1936 = vor.u32 1.1754944e-38, %v1935
        %v1937 = vsel %vm1934, %v1936, %v1932
        %v1938 = vmul.f32 %v1913, %v1937
        %v1939 = vmin.f32 %v1938, 1.0
        %v1940 = vmax.f32 %v1939, -1.0
        %v1941 = vmul.f32 %v1860, %v1860
        %v1942 = vmin.f32 16.0, %v1941
        %v1943 = vmul.f32 %v1942, 2.1237322e-06
        %v1944 = vadd.f32 %v1943, 0.00028619796
        %v1945 = vmul.f32 %v1942, %v1944
        %v1946 = vadd.f32 %v1945, 0.0036580483
        %v1947 = vmul.f32 %v1942, %v1946
        %v1948 = vadd.f32 %v1947, 0.05243302
        %v1949 = vmul.f32 %v1942, %v1948
        %v1950 = vadd.f32 %v1949, 0.18741608
        %v1951 = vmul.f32 %v1942, %v1950
        %v1952 = vadd.f32 %v1951, 1.1283791
        %v1953 = vmul.f32 %v1860, %v1952
        %v1954 = vmul.f32 %v1942, 3.8918573e-05
        %v1955 = vadd.f32 %v1954, 0.001143296
        %v1956 = vmul.f32 %v1942, %v1955
        %v1957 = vadd.f32 %v1956, 0.014752088
        %v1958 = vmul.f32 %v1942, %v1957
        %v1959 = vadd.f32 %v1958, 0.112945676
        %v1960 = vmul.f32 %v1942, %v1959
        %v1961 = vadd.f32 %v1960, 0.4994258
        %v1962 = vmul.f32 %v1942, %v1961
        %v1963 = vadd.f32 %v1962, 1.0
        %v1964 = vrcp.pop %v1963
        %v1965 = vmul.f32 %v1963, %v1964
        %v1966 = vsub.f32 1.0, %v1965
        %v1967 = vmul.f32 %v1964, %v1966
        %v1968 = vadd.f32 %v1964, %v1967
        %vm1969 = vweird.f32 %v1963
        %vm1970 = vweird.f32 %v1964
        %vm1971 = vmor %vm1969, %vm1970
        %v1972 = vsel %vm1971, %v1964, %v1968
        %v1973 = vand.u32 2147483647, %v1963
        %vm1974 = vcmp.eq.f32.partialorder %v1973, 8.507059e+37
        %v1975 = vand.u32 %v1963, 2147483648
        %v1976 = vor.u32 1.1754944e-38, %v1975
        %v1977 = vsel %vm1974, %v1976, %v1972
        %v1978 = vmul.f32 %v1953, %v1977
        %v1979 = vmin.f32 %v1978, 1.0
        %v1980 = vmax.f32 %v1979, -1.0
        %v1981 = vadd.f32 %v1900, 1.0
        %v1982 = vadd.f32 %v1940, 1.0
        %v1983 = vadd.f32 %v1980, 1.0
        %v1984 = vmul.f32 %v1855, %v1981
        %v1985 = vmul.f32 %v1856, %v1982
        %v1986 = vmul.f32 %v1857, %v1983
        %v1987 = vadd.f32 %v1514, %v1984
        %v1988 = vadd.f32 %v1515, %v1985
        %v1989 = vadd.f32 %v1516, %v1986
        %1990 = vst.msk [vmem:[#allocation2] sm:$0xff] %vm864, %v1987
        %1991 = vst.msk [vmem:[#allocation2 + $0x8] sm:$0xff] %vm864, %v1988
        %1992 = vst.msk [vmem:[#allocation2 + $0x10] sm:$0xff] %vm864, %v1989
        %p1993 = scmp.eq.s32.totalorder %s38, 1
        // Predicated region
        $region101: #{tpu_custom_call.1} parent=95 // pred_check
          %p1994 = pneg %p1993
        $region102: #{tpu_custom_call.1} parent=95 // pred_check_branch
          %1996 = sbr.rel (%p1994) target = $region104
        $region103: #{tpu_custom_call.1} parent=95 // pred_region
          %v1997 = vld [vmem:[%s15] sm:$0x1]
          %v1998 = vld [vmem:[%s16] sm:$0x1]
          %v1999 = vsel %vm864, %v1987, 0.0
          %2000 = vadd.xlane.f32.xlu0 %v1999
          %v2001 = vpop.xlane.xlu0 %2000
          %v2002 = vsel %vm864, %v1988, 0.0
          %2003 = vadd.xlane.f32.xlu0 %v2002
          %v2004 = vpop.xlane.xlu0 %2003
          %v2005 = vsel %vm864, %v1989, 0.0
          %2006 = vadd.xlane.f32.xlu0 %v2005
          %v2007 = vpop.xlane.xlu0 %2006
          %v2008 = vmul.f32 %v2001, %v880
          %v2009 = vmul.f32 %v2004, %v880
          %v2010 = vmul.f32 %v2007, %v880
          %v2011 = vsub.f32 %v1987, %v2008
          %v2012 = vsub.f32 %v1988, %v2009
          %v2013 = vsub.f32 %v1989, %v2010
          %v2014 = vmul.f32 %v2011, %v2011
          %v2015 = vmul.f32 %v2012, %v2012
          %v2016 = vmul.f32 %v2013, %v2013
          %v2017 = vsel %vm864, %v2014, 0.0
          %2018 = vadd.xlane.f32.xlu0 %v2017
          %v2019 = vpop.xlane.xlu0 %2018
          %v2020 = vsel %vm864, %v2015, 0.0
          %2021 = vadd.xlane.f32.xlu0 %v2020
          %v2022 = vpop.xlane.xlu0 %2021
          %v2023 = vsel %vm864, %v2016, 0.0
          %2024 = vadd.xlane.f32.xlu0 %v2023
          %v2025 = vpop.xlane.xlu0 %2024
          %v2026 = vmul.f32 %v2019, %v880
          %v2027 = vmul.f32 %v2022, %v880
          %v2028 = vmul.f32 %v2025, %v880
          %v2029 = vadd.f32 %v2026, 1e-05
          %v2030 = vadd.f32 %v2027, 1e-05
          %v2031 = vadd.f32 %v2028, 1e-05
          %v2032 = vrsqrt.pop %v2029
          %v2033 = vmul.f32 %v2032, %v2029
          %v2034 = vmul.f32 %v2033, %v2032
          %v2035 = vmul.f32 0.5, %v2034
          %v2036 = vsub.f32 1.5, %v2035
          %v2037 = vmul.f32 %v2032, %v2036
          %vm2038 = vweird.f32 %v2029
          %vm2039 = vweird.f32 %v2032
          %vm2040 = vmor %vm2038, %vm2039
          %v2041 = vsel %vm2040, %v2032, %v2037
          %v2042 = vrsqrt.pop %v2030
          %v2043 = vmul.f32 %v2042, %v2030
          %v2044 = vmul.f32 %v2043, %v2042
          %v2045 = vmul.f32 0.5, %v2044
          %v2046 = vsub.f32 1.5, %v2045
          %v2047 = vmul.f32 %v2042, %v2046
          %vm2048 = vweird.f32 %v2030
          %vm2049 = vweird.f32 %v2042
          %vm2050 = vmor %vm2048, %vm2049
          %v2051 = vsel %vm2050, %v2042, %v2047
          %v2052 = vrsqrt.pop %v2031
          %v2053 = vmul.f32 %v2052, %v2031
          %v2054 = vmul.f32 %v2053, %v2052
          %v2055 = vmul.f32 0.5, %v2054
          %v2056 = vsub.f32 1.5, %v2055
          %v2057 = vmul.f32 %v2052, %v2056
          %vm2058 = vweird.f32 %v2031
          %vm2059 = vweird.f32 %v2052
          %vm2060 = vmor %vm2058, %vm2059
          %v2061 = vsel %vm2060, %v2052, %v2057
          %v2062 = vmul.f32 %v2011, %v2041
          %v2063 = vmul.f32 %v2012, %v2051
          %v2064 = vmul.f32 %v2013, %v2061
          %v2066 = vperm.slane %v1997, 0
          %v2068 = vmul.f32 %v2062, %v2066
          %v2069 = vmul.f32 %v2063, %v2066
          %v2070 = vmul.f32 %v2064, %v2066
          %v2072 = vperm.slane %v1998, 0
          %v2074 = vadd.f32 %v2068, %v2072
          %v2075 = vadd.f32 %v2069, %v2072
          %v2076 = vadd.f32 %v2070, %v2072
          %v2077 = vpack.c.bf16 %v2075, %v2074
          %v2078 = vpack.c.bf16 %v2076, %v2076
          %v2079 = vld [vmem:[%s17] sm:$0xf]
          %v2080 = vld [vmem:[%s17 + $0x4] sm:$0xf]
          %v2081 = vld [vmem:[%s17 + $0x8] sm:$0xf]
          %v2082 = vld [vmem:[%s17 + $0xc] sm:$0xf]
          %v2083 = vld [vmem:[%s18] sm:$0x1]
          %v2085 = vperm.slane %v2083, 0
          %v2091 = vunpack.c.l.b16 %v2079
          %v2092 = vunpack.c.l.b16 %v2080
          %v2093 = vunpack.c.l.b16 %v2081
          %v2094 = vunpack.c.l.b16 %v2082
          %v2095 = vpack.c.b16 %v2092, %v2091
          %v2096 = vpack.c.b16 %v2094, %v2093
          %v2100 = vsel %vm864, %v2077, 0
          %v2103 = vsel %vm864, %v2078, 0
          %2105 = vmatpush.bf16.msra.mxu0 0
          %2106 = vmatpush.bf16.msra.mxu0 0
          %2107 = vmatpush.bf16.msra.mxu0 0
          %2108 = vmatpush.bf16.msra.mxu0 0
          %2109 = vmatpush.bf16.msra.mxu0 0
          %2110 = vmatpush.bf16.msra.mxu0 0
          %2111 = vmatpush.bf16.msra.mxu0 %v2096
          %2112 = vmatpush.bf16.msra.mxu0 %v2095
          %2113 = vmatmul.bf16.gmra.mxu0 %v2100
          %v2114 = vpop.f32.mrf.mxu0
          %v2115 = vadd.f32 %v2085, %v2114
          %v2116 = vpop.f32.mrf.mxu0
          %v2117 = vadd.f32 %v2085, %v2116
          %2118 = vmatmul.bf16.gmra.mxu0 %v2103
          %v2119 = vpop.f32.mrf.mxu0
          %v2120 = vadd.f32 %v2085, %v2119
          %v2121 = vpop.f32.mrf.mxu0
          %2122 = vdwg.mxu0
          %2123 = vst [vmem:[%s733] sm:$0xff] %v2115
          %2124 = vst [vmem:[%s733 + $0x8] sm:$0xff] %v2117
          %2125 = vst [vmem:[%s733 + $0x10] sm:$0xff] %v2120
        $region104: #{tpu_custom_call.1} parent=95 // pred_fallthru
          _
        %s2126 = sand.u32 %s507, 1
        %s2127 = scalar_lea.sflag [#allocation4], %s2126
        %s2128 = sand.u32 %s507, 1
        %s2129 = smul.addr %s2128, 24
        %s2130 = scalar_lea.vmem [#allocation3], %s2129
        // Predicated region
        $region105: #{tpu_custom_call.1} parent=95 // pred_check
          %p2131 = pneg %p517
        $region106: #{tpu_custom_call.1} parent=95 // pred_check_branch
          %2133 = sbr.rel (%p2131) target = $region108
        $region107: #{tpu_custom_call.1} parent=95 // pred_region
          %2135 = vsyncadd %s2127, 0
          %s2136 = smul.addr %s37, 3
          %s2137 = smul.addr %s2136, 8
          %s2138 = scalar_lea.hbm %s19, %s2137
          %s2139 = sshll.u32 %s2130, 4
          %s2140 = int_to_ptr.vmem [resolvable:$true] %s2139
          %s2141 = sshll.u32 %s2138, 4
          %s2142 = int_to_ptr.hbm [resolvable:$true] %s2141
          %2147 = dma.vmem_to_hbm [thread:$0]  %s2140, 384, %s2142, %s2127, 128, 128, 8
        $region108: #{tpu_custom_call.1} parent=95 // pred_fallthru
          _
      $region96: #{tpu_custom_call.1} parent=5 // pred_fallthru
        _
      %p2148 = scmp.le.s32.totalorder 2, %s28
      // Predicated region
      $region109: #{tpu_custom_call.1} parent=5 // pred_check
        %p2149 = pneg %p2148
      $region110: #{tpu_custom_call.1} parent=5 // pred_check_branch
        %2151 = sbr.rel (%p2149) target = $region112
      $region111: #{tpu_custom_call.1} parent=5 // pred_region
        %s2152 = ssub.s32 %s28, 2
        // Predicated region
        $region113: #{tpu_custom_call.1} parent=111 // pred_check
          %p2153 = pneg %p523
        $region114: #{tpu_custom_call.1} parent=111 // pred_check_branch
          %2155 = sbr.rel (%p2153) target = $region116
        $region115: #{tpu_custom_call.1} parent=111 // pred_region
          %s2156 = sand.u32 %s508, 1
          %s2157 = scalar_lea.sflag [#allocation4], %s2156
          %s2158 = sand.u32 %s508, 1
          %s2159 = smul.addr %s2158, 24
          %s2160 = scalar_lea.vmem [#allocation3], %s2159
          %2162 = dma.done %s2157, 384
        $region116: #{tpu_custom_call.1} parent=111 // pred_fallthru
          _
      $region112: #{tpu_custom_call.1} parent=5 // pred_fallthru
        _
    $region6: #{tpu_custom_call.1} parent=1 // loop_footer
      %s32 = sadd.s32 1, %s28
    $region7: #{tpu_custom_call.1} parent=1 // loop_footer_branch
      %27 = sbr.rel target = $region3
    $region8: #{tpu_custom_call.1} parent=1 // loop_exit
      _
    %2163 = vsyncpa [#allocation4], 1
    %s2164 = scalar_lea.sflag [#allocation4], 1
    %2165 = vsyncpa %s2164, 1

</llo_original>
